<compile_context>
chip_gen: v7x
topology: tpu7x:2x2x1
jax: 0.10.0
libtpu: 0.0.40
codegen_flags: <defaults>
</compile_context>

<pallas_src>
import jax
import jax.numpy as jnp
from jax.experimental import pallas as pl
from jax.experimental.pallas import tpu as pltpu


def _model_kernel(x1_ref, o_ref):
    x1 = x1_ref[...]
    # Feed the MXU at bf16 when the caller's input is bf16 (full MXU rate),
    # otherwise promote to f32. Accumulation is always f32.
    mm_dtype = jnp.bfloat16 if x1.dtype == jnp.bfloat16 else jnp.float32
    x1 = x1.astype(mm_dtype)

    v1 = jnp.transpose(x1, (2, 0, 1))   # x1.permute(2, 0, 1)
    v2 = jnp.transpose(x1, (0, 2, 1))   # x1.permute(0, 2, 1)
    v3 = jnp.transpose(x1, (1, 0, 2))   # x1.permute(1, 0, 2)
    s = v1 + v2 + v3 + x1               # v4 == x1 (identity permute); v0 := x1

    def bmm(a, b):
        # torch.matmul on 3-D tensors == batched matmul over the leading dim.
        return jnp.einsum('bij,bjk->bik', a, b,
                          preferred_element_type=jnp.float32)

    # Equivalent (by linearity) to the eight original batched matmuls.
    v5 = bmm(x1, s) + bmm(s, x1)
    o_ref[...] = v5.astype(o_ref.dtype)
    # NOTE: for tiny N the last dim (<128) means masked stores; a lane-dense
    # (N, N*N) output view would trim store time but costs an HBM relayout on
    # the way back out, so it is not worth it at these sizes.


def model_forward(x1, x2):
    """Pallas wrapper. x2 is accepted to match the torch signature but unused."""
    del x2  # unused in the original forward
    N0, N1, N2 = x1.shape
    assert N0 == N1 == N2, "permute/matmul chain requires a cube (N, N, N) input"
    N = N0

    # Whole problem (x1, S, output + transposed temporaries) must fit in VMEM:
    # roughly 6 live f32 cubes; keep well under the 32 MiB scoped default.
    # TODO(synk): for N >~ 180, tile the output over the batch axis instead
    # (grid=(cdiv(N, bt),), out block (bt, N, N), x1 kept full-resident, batch
    # axis marked "parallel" for v7x's two TensorCores, vmem_limit_bytes set).
    assert 6 * 4 * N ** 3 < 28 * 1024 * 1024, "input too large for the no-grid path"

    # Tiny-N case: no grid loop, no double-buffering — a single invocation with
    # the full (small) arrays resident in VMEM. A grid=(1,) pipeline would only
    # add per-step overhead and double the input/output VMEM footprint here.
    return pl.pallas_call(
        _model_kernel,
        out_shape=jax.ShapeDtypeStruct((N, N, N), jnp.float32),
        in_specs=[pl.BlockSpec(memory_space=pltpu.MemorySpace.VMEM)],
        out_specs=pl.BlockSpec(memory_space=pltpu.MemorySpace.VMEM),
    )(x1)


def _reference(x1):
    """Un-collapsed 8-matmul reference (mirrors the torch source, v0 := x1)."""
    x1 = x1.astype(jnp.float32)
    v0 = x1
    v1 = jnp.transpose(x1, (2, 0, 1))
    v2 = jnp.transpose(x1, (0, 2, 1))
    v3 = jnp.transpose(x1, (1, 0, 2))
    v4 = x1
    bmm = lambda a, b: jnp.einsum('bij,bjk->bik', a, b)
    return (bmm(v0, v1) + bmm(v1, x1) + bmm(x1, v2) + bmm(v2, x1)
            + bmm(x1, v3) + bmm(v3, x1) + bmm(x1, v4) + bmm(v4, x1))


if __name__ == "__main__":
    key = jax.random.PRNGKey(0)
    k1, k2 = jax.random.split(key)
    N = 8  # small cube; all permutes/matmuls shape-valid
    x1 = jax.random.normal(k1, (N, N, N), dtype=jnp.float32)
    x2 = jax.random.normal(k2, (N, N, N), dtype=jnp.float32)  # unused by forward

    out = jax.block_until_ready(model_forward(x1, x2))

    ref = _reference(x1)
    assert out.shape == (N, N, N)
    assert jnp.allclose(out, ref, atol=1e-4, rtol=1e-4)

    print("KERNEL_OK")
</pallas_src>

<mosaic_0001>
module attributes {stable_mosaic.version = 11 : i64} {
  func.func @_model_kernel(%arg0: memref<8x8x8xf32, #tpu.memory_space<vmem>>, %arg1: memref<8x8x8xf32, #tpu.memory_space<vmem>>) attributes {dimension_semantics = [], scalar_prefetch = 0 : i64, scratch_operands = 0 : i64, tpu.core_type = #tpu.core_type<tc>} {
    %c0 = arith.constant 0 : index
    %c0_0 = arith.constant 0 : index
    %c0_1 = arith.constant 0 : index
    %0 = vector.load %arg0[%c0, %c0_0, %c0_1] : memref<8x8x8xf32, #tpu.memory_space<vmem>>, vector<8x8x8xf32>
    %1 = tpu.transpose %0, [2, 0, 1] : vector<8x8x8xf32> -> vector<8x8x8xf32>
    %2 = tpu.transpose %0, [0, 2, 1] : vector<8x8x8xf32> -> vector<8x8x8xf32>
    %3 = tpu.transpose %0, [1, 0, 2] : vector<8x8x8xf32> -> vector<8x8x8xf32>
    %4 = arith.addf %1, %2 : vector<8x8x8xf32>
    %5 = arith.addf %4, %3 : vector<8x8x8xf32>
    %6 = arith.addf %5, %0 : vector<8x8x8xf32>
    "tpu.trace_start"() <{level = 10 : i32, message = "bij,bjk->bik"}> : () -> ()
    %cst = arith.constant dense<0.000000e+00> : vector<8x8x8xf32>
    %7 = tpu.matmul %0, %6, %cst {dimension_numbers = #tpu.dot_dimension_numbers<[2], [1], [1], [2], [0, 0, 0, 1, 1, 2], [0], [0]>} : vector<8x8x8xf32>, vector<8x8x8xf32>, vector<8x8x8xf32> -> vector<8x8x8xf32>
    %cst_2 = arith.constant dense<0.000000e+00> : vector<8x8x8xf32>
    %8 = tpu.matmul %6, %0, %cst_2 {dimension_numbers = #tpu.dot_dimension_numbers<[2], [1], [1], [2], [0, 0, 0, 1, 1, 2], [0], [0]>} : vector<8x8x8xf32>, vector<8x8x8xf32>, vector<8x8x8xf32> -> vector<8x8x8xf32>
    "tpu.trace_stop"() : () -> ()
    %9 = arith.addf %7, %8 : vector<8x8x8xf32>
    %c0_3 = arith.constant 0 : index
    %c0_4 = arith.constant 0 : index
    %c0_5 = arith.constant 0 : index
    %10 = vector.load %arg1[%c0_3, %c0_4, %c0_5] : memref<8x8x8xf32, #tpu.memory_space<vmem>>, vector<8x8x8xf32>
    tpu.vector_store %arg1[%c0_3, %c0_4, %c0_5], %9 {strides = array<i32>} : memref<8x8x8xf32, #tpu.memory_space<vmem>>, vector<8x8x8xf32>,
    return
  }
}

</mosaic_0001>

<llo_original>
// kernel: tpu_custom_call.1
$region0: #{tpu_custom_call.1}
  #allocation0 [shape = 'u32[]', space=smem, size = 0x4, offset = 0x4, fixed_abs, tag = 'smem constant byte address 0x4 - core index']
  #allocation1 [shape = 'u32[144,128]{1,0:T(1,128)}', space=vmem, size = 0x12000, scoped, tag = 'internal scratch']
  %s0 = inlined_call_operand.hbm [shape: f32[8,8,8], index: 0, kind: input, shape index: {}]
  %s1 = inlined_call_operand.hbm [shape: f32[8,8,8], index: 1, kind: output, shape index: {}]
  %s2 = sld [smem:[#allocation0]]
  $region18: #{tpu_custom_call.1} parent=0
    _
  %s4 = ssub.s32 1, %s2
  %s5 = scalar_select 0, %s4, %s2
  $region1: #{tpu_custom_call.1} parent=0
    #allocation2 [shape = 'u8[32768]{0}', space=vmem, size = 0x8000, scoped, tag = 'input window, operand 0, single buffered']
    #allocation3 [shape = 's32[1]{0}', space=sflag, size = 0x4, scoped, tag = 'scoped memory for tpu_custom_call.1']
    #allocation4 [shape = 's32[1]{0}', space=sflag, size = 0x4, scoped, tag = 'scoped memory for tpu_custom_call.1']
    #allocation5 [shape = 'u8[32768]{0}', space=vmem, size = 0x8000, scoped, tag = 'output window, operand 0, single buffered']
    %6 = vsyncpa [#allocation3], 0
    %7 = vsyncpa [#allocation4], 0
    // Predicated region
    $region2: #{tpu_custom_call.1} parent=1 // pred_check
      _
    $region3: #{tpu_custom_call.1} parent=1 // pred_check_branch
      %9 = sbr.rel (0) target = $region5
    $region4: #{tpu_custom_call.1} parent=1 // pred_region
      %s11 = ssub.s32 1024, 1024
      %12 = vsyncadd [#allocation3], %s11
      %s13 = sshll.u32 [#allocation2], 4
      %s14 = int_to_ptr.vmem [resolvable:$true] %s13
      %19 = dma.hbm_to_vmem [thread:$0]  %s0, 1024, %s14, [#allocation3], 128, 128, 8
    $region5: #{tpu_custom_call.1} parent=1 // pred_fallthru
      _
    // Predicated region
    $region6: #{tpu_custom_call.1} parent=1 // pred_check
      _
    $region7: #{tpu_custom_call.1} parent=1 // pred_check_branch
      %21 = sbr.rel (0) target = $region9
    $region8: #{tpu_custom_call.1} parent=1 // pred_region
      %22 = dma.done [#allocation3], 1024
    $region9: #{tpu_custom_call.1} parent=1 // pred_fallthru
      _
    %v23 = vld [vmem:[#allocation2] sm:$0xff]
    %v24 = vld [vmem:[#allocation2 + $0x8] sm:$0xff]
    %v25 = vld [vmem:[#allocation2 + $0x10] sm:$0xff]
    %v26 = vld [vmem:[#allocation2 + $0x18] sm:$0xff]
    %v27 = vld [vmem:[#allocation2 + $0x20] sm:$0xff]
    %v28 = vld [vmem:[#allocation2 + $0x28] sm:$0xff]
    %v29 = vld [vmem:[#allocation2 + $0x30] sm:$0xff]
    %v30 = vld [vmem:[#allocation2 + $0x38] sm:$0xff]
    %31 = vxpose.xlu0.b32.start [1/16] %v23, 128
    %32 = vxpose.xlu0.b32.cont [2/16] 0.0, 128
    %33 = vxpose.xlu0.b32.cont [3/16] 0.0, 128
    %34 = vxpose.xlu0.b32.cont [4/16] 0.0, 128
    %35 = vxpose.xlu0.b32.cont [5/16] 0.0, 128
    %36 = vxpose.xlu0.b32.cont [6/16] 0.0, 128
    %37 = vxpose.xlu0.b32.cont [7/16] 0.0, 128
    %38 = vxpose.xlu0.b32.cont [8/16] 0.0, 128
    %39 = vxpose.xlu0.b32.cont [9/16] 0.0, 128
    %40 = vxpose.xlu0.b32.cont [10/16] 0.0, 128
    %41 = vxpose.xlu0.b32.cont [11/16] 0.0, 128
    %42 = vxpose.xlu0.b32.cont [12/16] 0.0, 128
    %43 = vxpose.xlu0.b32.cont [13/16] 0.0, 128
    %44 = vxpose.xlu0.b32.cont [14/16] 0.0, 128
    %45 = vxpose.xlu0.b32.cont [15/16] 0.0, 128
    %46 = vxpose.xlu0.b32.end [16/16] 0.0, 128
    %v47 = vpop.trf.xlu0
    %v48 = vpop.trf.xlu0
    %v49 = vpop.trf.xlu0
    %v50 = vpop.trf.xlu0
    %v51 = vpop.trf.xlu0
    %v52 = vpop.trf.xlu0
    %v53 = vpop.trf.xlu0
    %v54 = vpop.trf.xlu0
    %v55 = vpop.trf.xlu0
    %v56 = vpop.trf.xlu0
    %v57 = vpop.trf.xlu0
    %v58 = vpop.trf.xlu0
    %v59 = vpop.trf.xlu0
    %v60 = vpop.trf.xlu0
    %v61 = vpop.trf.xlu0
    %v62 = vpop.trf.xlu0
    %63 = vxpose.xlu0.b32.start [1/16] %v24, 128
    %64 = vxpose.xlu0.b32.cont [2/16] 0.0, 128
    %65 = vxpose.xlu0.b32.cont [3/16] 0.0, 128
    %66 = vxpose.xlu0.b32.cont [4/16] 0.0, 128
    %67 = vxpose.xlu0.b32.cont [5/16] 0.0, 128
    %68 = vxpose.xlu0.b32.cont [6/16] 0.0, 128
    %69 = vxpose.xlu0.b32.cont [7/16] 0.0, 128
    %70 = vxpose.xlu0.b32.cont [8/16] 0.0, 128
    %71 = vxpose.xlu0.b32.cont [9/16] 0.0, 128
    %72 = vxpose.xlu0.b32.cont [10/16] 0.0, 128
    %73 = vxpose.xlu0.b32.cont [11/16] 0.0, 128
    %74 = vxpose.xlu0.b32.cont [12/16] 0.0, 128
    %75 = vxpose.xlu0.b32.cont [13/16] 0.0, 128
    %76 = vxpose.xlu0.b32.cont [14/16] 0.0, 128
    %77 = vxpose.xlu0.b32.cont [15/16] 0.0, 128
    %78 = vxpose.xlu0.b32.end [16/16] 0.0, 128
    %v79 = vpop.trf.xlu0
    %v80 = vpop.trf.xlu0
    %v81 = vpop.trf.xlu0
    %v82 = vpop.trf.xlu0
    %v83 = vpop.trf.xlu0
    %v84 = vpop.trf.xlu0
    %v85 = vpop.trf.xlu0
    %v86 = vpop.trf.xlu0
    %v87 = vpop.trf.xlu0
    %v88 = vpop.trf.xlu0
    %v89 = vpop.trf.xlu0
    %v90 = vpop.trf.xlu0
    %v91 = vpop.trf.xlu0
    %v92 = vpop.trf.xlu0
    %v93 = vpop.trf.xlu0
    %v94 = vpop.trf.xlu0
    %95 = vxpose.xlu0.b32.start [1/16] %v25, 128
    %96 = vxpose.xlu0.b32.cont [2/16] 0.0, 128
    %97 = vxpose.xlu0.b32.cont [3/16] 0.0, 128
    %98 = vxpose.xlu0.b32.cont [4/16] 0.0, 128
    %99 = vxpose.xlu0.b32.cont [5/16] 0.0, 128
    %100 = vxpose.xlu0.b32.cont [6/16] 0.0, 128
    %101 = vxpose.xlu0.b32.cont [7/16] 0.0, 128
    %102 = vxpose.xlu0.b32.cont [8/16] 0.0, 128
    %103 = vxpose.xlu0.b32.cont [9/16] 0.0, 128
    %104 = vxpose.xlu0.b32.cont [10/16] 0.0, 128
    %105 = vxpose.xlu0.b32.cont [11/16] 0.0, 128
    %106 = vxpose.xlu0.b32.cont [12/16] 0.0, 128
    %107 = vxpose.xlu0.b32.cont [13/16] 0.0, 128
    %108 = vxpose.xlu0.b32.cont [14/16] 0.0, 128
    %109 = vxpose.xlu0.b32.cont [15/16] 0.0, 128
    %110 = vxpose.xlu0.b32.end [16/16] 0.0, 128
    %v111 = vpop.trf.xlu0
    %v112 = vpop.trf.xlu0
    %v113 = vpop.trf.xlu0
    %v114 = vpop.trf.xlu0
    %v115 = vpop.trf.xlu0
    %v116 = vpop.trf.xlu0
    %v117 = vpop.trf.xlu0
    %v118 = vpop.trf.xlu0
    %v119 = vpop.trf.xlu0
    %v120 = vpop.trf.xlu0
    %v121 = vpop.trf.xlu0
    %v122 = vpop.trf.xlu0
    %v123 = vpop.trf.xlu0
    %v124 = vpop.trf.xlu0
    %v125 = vpop.trf.xlu0
    %v126 = vpop.trf.xlu0
    %127 = vxpose.xlu0.b32.start [1/16] %v26, 128
    %128 = vxpose.xlu0.b32.cont [2/16] 0.0, 128
    %129 = vxpose.xlu0.b32.cont [3/16] 0.0, 128
    %130 = vxpose.xlu0.b32.cont [4/16] 0.0, 128
    %131 = vxpose.xlu0.b32.cont [5/16] 0.0, 128
    %132 = vxpose.xlu0.b32.cont [6/16] 0.0, 128
    %133 = vxpose.xlu0.b32.cont [7/16] 0.0, 128
    %134 = vxpose.xlu0.b32.cont [8/16] 0.0, 128
    %135 = vxpose.xlu0.b32.cont [9/16] 0.0, 128
    %136 = vxpose.xlu0.b32.cont [10/16] 0.0, 128
    %137 = vxpose.xlu0.b32.cont [11/16] 0.0, 128
    %138 = vxpose.xlu0.b32.cont [12/16] 0.0, 128
    %139 = vxpose.xlu0.b32.cont [13/16] 0.0, 128
    %140 = vxpose.xlu0.b32.cont [14/16] 0.0, 128
    %141 = vxpose.xlu0.b32.cont [15/16] 0.0, 128
    %142 = vxpose.xlu0.b32.end [16/16] 0.0, 128
    %v143 = vpop.trf.xlu0
    %v144 = vpop.trf.xlu0
    %v145 = vpop.trf.xlu0
    %v146 = vpop.trf.xlu0
    %v147 = vpop.trf.xlu0
    %v148 = vpop.trf.xlu0
    %v149 = vpop.trf.xlu0
    %v150 = vpop.trf.xlu0
    %v151 = vpop.trf.xlu0
    %v152 = vpop.trf.xlu0
    %v153 = vpop.trf.xlu0
    %v154 = vpop.trf.xlu0
    %v155 = vpop.trf.xlu0
    %v156 = vpop.trf.xlu0
    %v157 = vpop.trf.xlu0
    %v158 = vpop.trf.xlu0
    %159 = vxpose.xlu0.b32.start [1/16] %v27, 128
    %160 = vxpose.xlu0.b32.cont [2/16] 0.0, 128
    %161 = vxpose.xlu0.b32.cont [3/16] 0.0, 128
    %162 = vxpose.xlu0.b32.cont [4/16] 0.0, 128
    %163 = vxpose.xlu0.b32.cont [5/16] 0.0, 128
    %164 = vxpose.xlu0.b32.cont [6/16] 0.0, 128
    %165 = vxpose.xlu0.b32.cont [7/16] 0.0, 128
    %166 = vxpose.xlu0.b32.cont [8/16] 0.0, 128
    %167 = vxpose.xlu0.b32.cont [9/16] 0.0, 128
    %168 = vxpose.xlu0.b32.cont [10/16] 0.0, 128
    %169 = vxpose.xlu0.b32.cont [11/16] 0.0, 128
    %170 = vxpose.xlu0.b32.cont [12/16] 0.0, 128
    %171 = vxpose.xlu0.b32.cont [13/16] 0.0, 128
    %172 = vxpose.xlu0.b32.cont [14/16] 0.0, 128
    %173 = vxpose.xlu0.b32.cont [15/16] 0.0, 128
    %174 = vxpose.xlu0.b32.end [16/16] 0.0, 128
    %v175 = vpop.trf.xlu0
    %v176 = vpop.trf.xlu0
    %v177 = vpop.trf.xlu0
    %v178 = vpop.trf.xlu0
    %v179 = vpop.trf.xlu0
    %v180 = vpop.trf.xlu0
    %v181 = vpop.trf.xlu0
    %v182 = vpop.trf.xlu0
    %v183 = vpop.trf.xlu0
    %v184 = vpop.trf.xlu0
    %v185 = vpop.trf.xlu0
    %v186 = vpop.trf.xlu0
    %v187 = vpop.trf.xlu0
    %v188 = vpop.trf.xlu0
    %v189 = vpop.trf.xlu0
    %v190 = vpop.trf.xlu0
    %191 = vxpose.xlu0.b32.start [1/16] %v28, 128
    %192 = vxpose.xlu0.b32.cont [2/16] 0.0, 128
    %193 = vxpose.xlu0.b32.cont [3/16] 0.0, 128
    %194 = vxpose.xlu0.b32.cont [4/16] 0.0, 128
    %195 = vxpose.xlu0.b32.cont [5/16] 0.0, 128
    %196 = vxpose.xlu0.b32.cont [6/16] 0.0, 128
    %197 = vxpose.xlu0.b32.cont [7/16] 0.0, 128
    %198 = vxpose.xlu0.b32.cont [8/16] 0.0, 128
    %199 = vxpose.xlu0.b32.cont [9/16] 0.0, 128
    %200 = vxpose.xlu0.b32.cont [10/16] 0.0, 128
    %201 = vxpose.xlu0.b32.cont [11/16] 0.0, 128
    %202 = vxpose.xlu0.b32.cont [12/16] 0.0, 128
    %203 = vxpose.xlu0.b32.cont [13/16] 0.0, 128
    %204 = vxpose.xlu0.b32.cont [14/16] 0.0, 128
    %205 = vxpose.xlu0.b32.cont [15/16] 0.0, 128
    %206 = vxpose.xlu0.b32.end [16/16] 0.0, 128
    %v207 = vpop.trf.xlu0
    %v208 = vpop.trf.xlu0
    %v209 = vpop.trf.xlu0
    %v210 = vpop.trf.xlu0
    %v211 = vpop.trf.xlu0
    %v212 = vpop.trf.xlu0
    %v213 = vpop.trf.xlu0
    %v214 = vpop.trf.xlu0
    %v215 = vpop.trf.xlu0
    %v216 = vpop.trf.xlu0
    %v217 = vpop.trf.xlu0
    %v218 = vpop.trf.xlu0
    %v219 = vpop.trf.xlu0
    %v220 = vpop.trf.xlu0
    %v221 = vpop.trf.xlu0
    %v222 = vpop.trf.xlu0
    %223 = vxpose.xlu0.b32.start [1/16] %v29, 128
    %224 = vxpose.xlu0.b32.cont [2/16] 0.0, 128
    %225 = vxpose.xlu0.b32.cont [3/16] 0.0, 128
    %226 = vxpose.xlu0.b32.cont [4/16] 0.0, 128
    %227 = vxpose.xlu0.b32.cont [5/16] 0.0, 128
    %228 = vxpose.xlu0.b32.cont [6/16] 0.0, 128
    %229 = vxpose.xlu0.b32.cont [7/16] 0.0, 128
    %230 = vxpose.xlu0.b32.cont [8/16] 0.0, 128
    %231 = vxpose.xlu0.b32.cont [9/16] 0.0, 128
    %232 = vxpose.xlu0.b32.cont [10/16] 0.0, 128
    %233 = vxpose.xlu0.b32.cont [11/16] 0.0, 128
    %234 = vxpose.xlu0.b32.cont [12/16] 0.0, 128
    %235 = vxpose.xlu0.b32.cont [13/16] 0.0, 128
    %236 = vxpose.xlu0.b32.cont [14/16] 0.0, 128
    %237 = vxpose.xlu0.b32.cont [15/16] 0.0, 128
    %238 = vxpose.xlu0.b32.end [16/16] 0.0, 128
    %v239 = vpop.trf.xlu0
    %v240 = vpop.trf.xlu0
    %v241 = vpop.trf.xlu0
    %v242 = vpop.trf.xlu0
    %v243 = vpop.trf.xlu0
    %v244 = vpop.trf.xlu0
    %v245 = vpop.trf.xlu0
    %v246 = vpop.trf.xlu0
    %v247 = vpop.trf.xlu0
    %v248 = vpop.trf.xlu0
    %v249 = vpop.trf.xlu0
    %v250 = vpop.trf.xlu0
    %v251 = vpop.trf.xlu0
    %v252 = vpop.trf.xlu0
    %v253 = vpop.trf.xlu0
    %v254 = vpop.trf.xlu0
    %255 = vxpose.xlu0.b32.start [1/16] %v30, 128
    %256 = vxpose.xlu0.b32.cont [2/16] 0.0, 128
    %257 = vxpose.xlu0.b32.cont [3/16] 0.0, 128
    %258 = vxpose.xlu0.b32.cont [4/16] 0.0, 128
    %259 = vxpose.xlu0.b32.cont [5/16] 0.0, 128
    %260 = vxpose.xlu0.b32.cont [6/16] 0.0, 128
    %261 = vxpose.xlu0.b32.cont [7/16] 0.0, 128
    %262 = vxpose.xlu0.b32.cont [8/16] 0.0, 128
    %263 = vxpose.xlu0.b32.cont [9/16] 0.0, 128
    %264 = vxpose.xlu0.b32.cont [10/16] 0.0, 128
    %265 = vxpose.xlu0.b32.cont [11/16] 0.0, 128
    %266 = vxpose.xlu0.b32.cont [12/16] 0.0, 128
    %267 = vxpose.xlu0.b32.cont [13/16] 0.0, 128
    %268 = vxpose.xlu0.b32.cont [14/16] 0.0, 128
    %269 = vxpose.xlu0.b32.cont [15/16] 0.0, 128
    %270 = vxpose.xlu0.b32.end [16/16] 0.0, 128
    %v271 = vpop.trf.xlu0
    %v272 = vpop.trf.xlu0
    %v273 = vpop.trf.xlu0
    %v274 = vpop.trf.xlu0
    %v275 = vpop.trf.xlu0
    %v276 = vpop.trf.xlu0
    %v277 = vpop.trf.xlu0
    %v278 = vpop.trf.xlu0
    %v279 = vpop.trf.xlu0
    %v280 = vpop.trf.xlu0
    %v281 = vpop.trf.xlu0
    %v282 = vpop.trf.xlu0
    %v283 = vpop.trf.xlu0
    %v284 = vpop.trf.xlu0
    %v285 = vpop.trf.xlu0
    %v286 = vpop.trf.xlu0
    %v287 = vcombine.low %v47, %v111
    %v288 = vcombine.high %v47, %v111
    %v290 = vunpack.c.l.s4 1983009808
    %v291 = vunpack.c.0.s8 %v290
    %v292 = vlaneseq
    %v293 = vshrl.u32 %v292, 7
    %v294 = vsub.s32 %v291, %v293
    %v295 = vrot.slane %v287, %v294
    %v297 = vunpack.c.l.s4 1983009808
    %v298 = vunpack.c.0.s8 %v297
    %v299 = vlaneseq
    %v300 = vshrl.u32 %v299, 7
    %v301 = vsub.s32 %v298, %v300
    %v302 = vrot.slane %v288, %v301
    %v303 = vcombine.low %v79, %v143
    %v304 = vcombine.high %v79, %v143
    %v306 = vunpack.c.l.s4 1983009808
    %v307 = vunpack.c.0.s8 %v306
    %v308 = vlaneseq
    %v309 = vshrl.u32 %v308, 7
    %v310 = vsub.s32 %v307, %v309
    %v311 = vrot.slane %v303, %v310
    %v313 = vunpack.c.l.s4 1983009808
    %v314 = vunpack.c.0.s8 %v313
    %v315 = vlaneseq
    %v316 = vshrl.u32 %v315, 7
    %v317 = vsub.s32 %v314, %v316
    %v318 = vrot.slane %v304, %v317
    %v319 = vcombine.low %v175, %v239
    %v320 = vcombine.high %v175, %v239
    %v322 = vunpack.c.l.s4 1983009808
    %v323 = vunpack.c.0.s8 %v322
    %v324 = vlaneseq
    %v325 = vshrl.u32 %v324, 7
    %v326 = vsub.s32 %v323, %v325
    %v327 = vrot.slane %v319, %v326
    %v329 = vunpack.c.l.s4 1983009808
    %v330 = vunpack.c.0.s8 %v329
    %v331 = vlaneseq
    %v332 = vshrl.u32 %v331, 7
    %v333 = vsub.s32 %v330, %v332
    %v334 = vrot.slane %v320, %v333
    %v335 = vcombine.low %v207, %v271
    %v336 = vcombine.high %v207, %v271
    %v338 = vunpack.c.l.s4 1983009808
    %v339 = vunpack.c.0.s8 %v338
    %v340 = vlaneseq
    %v341 = vshrl.u32 %v340, 7
    %v342 = vsub.s32 %v339, %v341
    %v343 = vrot.slane %v335, %v342
    %v345 = vunpack.c.l.s4 1983009808
    %v346 = vunpack.c.0.s8 %v345
    %v347 = vlaneseq
    %v348 = vshrl.u32 %v347, 7
    %v349 = vsub.s32 %v346, %v348
    %v350 = vrot.slane %v336, %v349
    %v351 = vcombine.low %v295, %v311
    %v352 = vcombine.high %v295, %v311
    %v354 = vunpack.c.l.s4 1934713408
    %v355 = vunpack.c.0.s8 %v354
    %v356 = vlaneseq
    %v357 = vshrl.u32 %v356, 7
    %v358 = vsub.s32 %v355, %v357
    %v359 = vrot.slane %v351, %v358
    %v361 = vunpack.c.l.s4 1934713408
    %v362 = vunpack.c.0.s8 %v361
    %v363 = vlaneseq
    %v364 = vshrl.u32 %v363, 7
    %v365 = vsub.s32 %v362, %v364
    %v366 = vrot.slane %v352, %v365
    %v367 = vcombine.low %v302, %v318
    %v368 = vcombine.high %v302, %v318
    %v370 = vunpack.c.l.s4 1934713408
    %v371 = vunpack.c.0.s8 %v370
    %v372 = vlaneseq
    %v373 = vshrl.u32 %v372, 7
    %v374 = vsub.s32 %v371, %v373
    %v375 = vrot.slane %v367, %v374
    %v377 = vunpack.c.l.s4 1934713408
    %v378 = vunpack.c.0.s8 %v377
    %v379 = vlaneseq
    %v380 = vshrl.u32 %v379, 7
    %v381 = vsub.s32 %v378, %v380
    %v382 = vrot.slane %v368, %v381
    %v383 = vcombine.low %v327, %v343
    %v384 = vcombine.high %v327, %v343
    %v386 = vunpack.c.l.s4 1934713408
    %v387 = vunpack.c.0.s8 %v386
    %v388 = vlaneseq
    %v389 = vshrl.u32 %v388, 7
    %v390 = vsub.s32 %v387, %v389
    %v391 = vrot.slane %v383, %v390
    %v393 = vunpack.c.l.s4 1934713408
    %v394 = vunpack.c.0.s8 %v393
    %v395 = vlaneseq
    %v396 = vshrl.u32 %v395, 7
    %v397 = vsub.s32 %v394, %v396
    %v398 = vrot.slane %v384, %v397
    %v399 = vcombine.low %v334, %v350
    %v400 = vcombine.high %v334, %v350
    %v402 = vunpack.c.l.s4 1934713408
    %v403 = vunpack.c.0.s8 %v402
    %v404 = vlaneseq
    %v405 = vshrl.u32 %v404, 7
    %v406 = vsub.s32 %v403, %v405
    %v407 = vrot.slane %v399, %v406
    %v409 = vunpack.c.l.s4 1934713408
    %v410 = vunpack.c.0.s8 %v409
    %v411 = vlaneseq
    %v412 = vshrl.u32 %v411, 7
    %v413 = vsub.s32 %v410, %v412
    %v414 = vrot.slane %v400, %v413
    %v415 = vcombine.low %v359, %v391
    %v416 = vcombine.high %v359, %v391
    %v417 = vcombine.low %v366, %v398
    %v418 = vcombine.high %v366, %v398
    %v419 = vcombine.low %v375, %v407
    %v420 = vcombine.high %v375, %v407
    %v421 = vcombine.low %v382, %v414
    %v422 = vcombine.high %v382, %v414
    %v423 = vcombine.low %v23, %v25
    %v424 = vcombine.high %v23, %v25
    %v426 = vunpack.c.l.s4 1983009808
    %v427 = vunpack.c.0.s8 %v426
    %v428 = vlaneseq
    %v429 = vshrl.u32 %v428, 7
    %v430 = vsub.s32 %v427, %v429
    %v431 = vrot.slane %v423, %v430
    %v433 = vunpack.c.l.s4 1983009808
    %v434 = vunpack.c.0.s8 %v433
    %v435 = vlaneseq
    %v436 = vshrl.u32 %v435, 7
    %v437 = vsub.s32 %v434, %v436
    %v438 = vrot.slane %v424, %v437
    %v439 = vcombine.low %v24, %v26
    %v440 = vcombine.high %v24, %v26
    %v442 = vunpack.c.l.s4 1983009808
    %v443 = vunpack.c.0.s8 %v442
    %v444 = vlaneseq
    %v445 = vshrl.u32 %v444, 7
    %v446 = vsub.s32 %v443, %v445
    %v447 = vrot.slane %v439, %v446
    %v449 = vunpack.c.l.s4 1983009808
    %v450 = vunpack.c.0.s8 %v449
    %v451 = vlaneseq
    %v452 = vshrl.u32 %v451, 7
    %v453 = vsub.s32 %v450, %v452
    %v454 = vrot.slane %v440, %v453
    %v455 = vcombine.low %v27, %v29
    %v456 = vcombine.high %v27, %v29
    %v458 = vunpack.c.l.s4 1983009808
    %v459 = vunpack.c.0.s8 %v458
    %v460 = vlaneseq
    %v461 = vshrl.u32 %v460, 7
    %v462 = vsub.s32 %v459, %v461
    %v463 = vrot.slane %v455, %v462
    %v465 = vunpack.c.l.s4 1983009808
    %v466 = vunpack.c.0.s8 %v465
    %v467 = vlaneseq
    %v468 = vshrl.u32 %v467, 7
    %v469 = vsub.s32 %v466, %v468
    %v470 = vrot.slane %v456, %v469
    %v471 = vcombine.low %v28, %v30
    %v472 = vcombine.high %v28, %v30
    %v474 = vunpack.c.l.s4 1983009808
    %v475 = vunpack.c.0.s8 %v474
    %v476 = vlaneseq
    %v477 = vshrl.u32 %v476, 7
    %v478 = vsub.s32 %v475, %v477
    %v479 = vrot.slane %v471, %v478
    %v481 = vunpack.c.l.s4 1983009808
    %v482 = vunpack.c.0.s8 %v481
    %v483 = vlaneseq
    %v484 = vshrl.u32 %v483, 7
    %v485 = vsub.s32 %v482, %v484
    %v486 = vrot.slane %v472, %v485
    %v487 = vcombine.low %v431, %v447
    %v488 = vcombine.high %v431, %v447
    %v490 = vunpack.c.l.s4 1934713408
    %v491 = vunpack.c.0.s8 %v490
    %v492 = vlaneseq
    %v493 = vshrl.u32 %v492, 7
    %v494 = vsub.s32 %v491, %v493
    %v495 = vrot.slane %v487, %v494
    %v497 = vunpack.c.l.s4 1934713408
    %v498 = vunpack.c.0.s8 %v497
    %v499 = vlaneseq
    %v500 = vshrl.u32 %v499, 7
    %v501 = vsub.s32 %v498, %v500
    %v502 = vrot.slane %v488, %v501
    %v503 = vcombine.low %v438, %v454
    %v504 = vcombine.high %v438, %v454
    %v506 = vunpack.c.l.s4 1934713408
    %v507 = vunpack.c.0.s8 %v506
    %v508 = vlaneseq
    %v509 = vshrl.u32 %v508, 7
    %v510 = vsub.s32 %v507, %v509
    %v511 = vrot.slane %v503, %v510
    %v513 = vunpack.c.l.s4 1934713408
    %v514 = vunpack.c.0.s8 %v513
    %v515 = vlaneseq
    %v516 = vshrl.u32 %v515, 7
    %v517 = vsub.s32 %v514, %v516
    %v518 = vrot.slane %v504, %v517
    %v519 = vcombine.low %v463, %v479
    %v520 = vcombine.high %v463, %v479
    %v522 = vunpack.c.l.s4 1934713408
    %v523 = vunpack.c.0.s8 %v522
    %v524 = vlaneseq
    %v525 = vshrl.u32 %v524, 7
    %v526 = vsub.s32 %v523, %v525
    %v527 = vrot.slane %v519, %v526
    %v529 = vunpack.c.l.s4 1934713408
    %v530 = vunpack.c.0.s8 %v529
    %v531 = vlaneseq
    %v532 = vshrl.u32 %v531, 7
    %v533 = vsub.s32 %v530, %v532
    %v534 = vrot.slane %v520, %v533
    %v535 = vcombine.low %v470, %v486
    %v536 = vcombine.high %v470, %v486
    %v538 = vunpack.c.l.s4 1934713408
    %v539 = vunpack.c.0.s8 %v538
    %v540 = vlaneseq
    %v541 = vshrl.u32 %v540, 7
    %v542 = vsub.s32 %v539, %v541
    %v543 = vrot.slane %v535, %v542
    %v545 = vunpack.c.l.s4 1934713408
    %v546 = vunpack.c.0.s8 %v545
    %v547 = vlaneseq
    %v548 = vshrl.u32 %v547, 7
    %v549 = vsub.s32 %v546, %v548
    %v550 = vrot.slane %v536, %v549
    %v551 = vcombine.low %v495, %v527
    %v552 = vcombine.high %v495, %v527
    %v553 = vcombine.low %v502, %v534
    %v554 = vcombine.high %v502, %v534
    %v555 = vcombine.low %v511, %v543
    %v556 = vcombine.high %v511, %v543
    %v557 = vcombine.low %v518, %v550
    %v558 = vcombine.high %v518, %v550
    %v559 = vadd.f32 %v415, %v47
    %v560 = vadd.f32 %v416, %v79
    %v561 = vadd.f32 %v417, %v111
    %v562 = vadd.f32 %v418, %v143
    %v563 = vadd.f32 %v419, %v175
    %v564 = vadd.f32 %v420, %v207
    %v565 = vadd.f32 %v421, %v239
    %v566 = vadd.f32 %v422, %v271
    %v567 = vadd.f32 %v559, %v551
    %v568 = vadd.f32 %v560, %v552
    %v569 = vadd.f32 %v561, %v553
    %v570 = vadd.f32 %v562, %v554
    %v571 = vadd.f32 %v563, %v555
    %v572 = vadd.f32 %v564, %v556
    %v573 = vadd.f32 %v565, %v557
    %v574 = vadd.f32 %v566, %v558
    %v575 = vadd.f32 %v567, %v23
    %v576 = vadd.f32 %v568, %v24
    %v577 = vadd.f32 %v569, %v25
    %v578 = vadd.f32 %v570, %v26
    %v579 = vadd.f32 %v571, %v27
    %v580 = vadd.f32 %v572, %v28
    %v581 = vadd.f32 %v573, %v29
    %v582 = vadd.f32 %v574, %v30
    %vm583 = vcmask 64512
    %v585 = vsel %vm583, %v575, 0
    %587 = vmatprep.subr.mxu0 0.0
    %588 = vmatpush1.msra.mxu0 %v23
    %589 = vmatprep.subr.mxu0 0.0
    %590 = vmatpush1.msra.mxu0 0.0
    %591 = vmatprep.subr.mxu0 0.0
    %592 = vmatpush1.msra.mxu0 0.0
    %593 = vmatprep.subr.mxu0 0.0
    %594 = vmatpush1.msra.mxu0 0.0
    %595 = vmatprep.subr.mxu0 0.0
    %596 = vmatpush1.msra.mxu0 0.0
    %597 = vmatprep.subr.mxu0 0.0
    %598 = vmatpush1.msra.mxu0 0.0
    %599 = vmatprep.subr.mxu0 0.0
    %600 = vmatpush1.msra.mxu0 0.0
    %601 = vmatprep.subr.mxu0 0.0
    %602 = vmatpush1.msra.mxu0 0.0
    %603 = vmatprep.subr.mxu0 0.0
    %604 = vmatpush1.msra.mxu0 0.0
    %605 = vmatprep.subr.mxu0 0.0
    %606 = vmatpush1.msra.mxu0 0.0
    %607 = vmatprep.subr.mxu0 0.0
    %608 = vmatpush1.msra.mxu0 0.0
    %609 = vmatprep.subr.mxu0 0.0
    %610 = vmatpush1.msra.mxu0 0.0
    %611 = vmatprep.subr.mxu0 0.0
    %612 = vmatpush1.msra.mxu0 0.0
    %613 = vmatprep.subr.mxu0 0.0
    %614 = vmatpush1.msra.mxu0 0.0
    %615 = vmatprep.subr.mxu0 0.0
    %616 = vmatpush1.msra.mxu0 0.0
    %617 = vmatprep.subr.mxu0 0.0
    %618 = vmatpush1.msra.mxu0 0.0
    %619 = vmatprep.subr.mxu0 0.0
    %620 = vmatpush1.msra.mxu0 0.0
    %621 = vmatprep.subr.mxu0 0.0
    %622 = vmatpush1.msra.mxu0 0.0
    %623 = vmatprep.subr.mxu0 0.0
    %624 = vmatpush1.msra.mxu0 0.0
    %625 = vmatprep.subr.mxu0 0.0
    %626 = vmatpush1.msra.mxu0 0.0
    %627 = vmatprep.subr.mxu0 0.0
    %628 = vmatpush1.msra.mxu0 0.0
    %629 = vmatprep.subr.mxu0 0.0
    %630 = vmatpush1.msra.mxu0 0.0
    %631 = vmatprep.subr.mxu0 0.0
    %632 = vmatpush1.msra.mxu0 0.0
    %633 = vmatprep.subr.mxu0 0.0
    %634 = vmatpush1.msra.mxu0 0.0
    %635 = vmatprep.subr.mxu0 0.0
    %636 = vmatpush1.msra.mxu0 0.0
    %637 = vmatprep.subr.mxu0 0.0
    %638 = vmatpush1.msra.mxu0 0.0
    %639 = vmatprep.subr.mxu0 0.0
    %640 = vmatpush1.msra.mxu0 0.0
    %641 = vmatprep.subr.mxu0 0.0
    %642 = vmatpush1.msra.mxu0 0.0
    %643 = vmatprep.subr.mxu0 0.0
    %644 = vmatpush1.msra.mxu0 0.0
    %645 = vmatprep.subr.mxu0 0.0
    %646 = vmatpush1.msra.mxu0 0.0
    %647 = vmatprep.subr.mxu0 0.0
    %648 = vmatpush1.msra.mxu0 0.0
    %649 = vmatprep.subr.mxu0 0.0
    %650 = vmatpush1.msra.mxu0 0.0
    %651 = vmatprep.mubr.f32.mxu0 0.0
    %652 = vmatmul.mubr.f32.gmra.mrb[0].mxu0 %v585
    %v653 = vpop.f32.mrb[0].mxu0
    %v654 = vadd.f32 0.0, %v653
    %v655 = vpop.f32.mrb[0].mxu0
    %656 = vdwg.mxu0
    %v658 = vsel %vm583, %v576, 0
    %660 = vmatprep.subr.mxu0 0.0
    %661 = vmatpush1.msra.mxu0 %v24
    %662 = vmatprep.subr.mxu0 0.0
    %663 = vmatpush1.msra.mxu0 0.0
    %664 = vmatprep.subr.mxu0 0.0
    %665 = vmatpush1.msra.mxu0 0.0
    %666 = vmatprep.subr.mxu0 0.0
    %667 = vmatpush1.msra.mxu0 0.0
    %668 = vmatprep.subr.mxu0 0.0
    %669 = vmatpush1.msra.mxu0 0.0
    %670 = vmatprep.subr.mxu0 0.0
    %671 = vmatpush1.msra.mxu0 0.0
    %672 = vmatprep.subr.mxu0 0.0
    %673 = vmatpush1.msra.mxu0 0.0
    %674 = vmatprep.subr.mxu0 0.0
    %675 = vmatpush1.msra.mxu0 0.0
    %676 = vmatprep.subr.mxu0 0.0
    %677 = vmatpush1.msra.mxu0 0.0
    %678 = vmatprep.subr.mxu0 0.0
    %679 = vmatpush1.msra.mxu0 0.0
    %680 = vmatprep.subr.mxu0 0.0
    %681 = vmatpush1.msra.mxu0 0.0
    %682 = vmatprep.subr.mxu0 0.0
    %683 = vmatpush1.msra.mxu0 0.0
    %684 = vmatprep.subr.mxu0 0.0
    %685 = vmatpush1.msra.mxu0 0.0
    %686 = vmatprep.subr.mxu0 0.0
    %687 = vmatpush1.msra.mxu0 0.0
    %688 = vmatprep.subr.mxu0 0.0
    %689 = vmatpush1.msra.mxu0 0.0
    %690 = vmatprep.subr.mxu0 0.0
    %691 = vmatpush1.msra.mxu0 0.0
    %692 = vmatprep.subr.mxu0 0.0
    %693 = vmatpush1.msra.mxu0 0.0
    %694 = vmatprep.subr.mxu0 0.0
    %695 = vmatpush1.msra.mxu0 0.0
    %696 = vmatprep.subr.mxu0 0.0
    %697 = vmatpush1.msra.mxu0 0.0
    %698 = vmatprep.subr.mxu0 0.0
    %699 = vmatpush1.msra.mxu0 0.0
    %700 = vmatprep.subr.mxu0 0.0
    %701 = vmatpush1.msra.mxu0 0.0
    %702 = vmatprep.subr.mxu0 0.0
    %703 = vmatpush1.msra.mxu0 0.0
    %704 = vmatprep.subr.mxu0 0.0
    %705 = vmatpush1.msra.mxu0 0.0
    %706 = vmatprep.subr.mxu0 0.0
    %707 = vmatpush1.msra.mxu0 0.0
    %708 = vmatprep.subr.mxu0 0.0
    %709 = vmatpush1.msra.mxu0 0.0
    %710 = vmatprep.subr.mxu0 0.0
    %711 = vmatpush1.msra.mxu0 0.0
    %712 = vmatprep.subr.mxu0 0.0
    %713 = vmatpush1.msra.mxu0 0.0
    %714 = vmatprep.subr.mxu0 0.0
    %715 = vmatpush1.msra.mxu0 0.0
    %716 = vmatprep.subr.mxu0 0.0
    %717 = vmatpush1.msra.mxu0 0.0
    %718 = vmatprep.subr.mxu0 0.0
    %719 = vmatpush1.msra.mxu0 0.0
    %720 = vmatprep.subr.mxu0 0.0
    %721 = vmatpush1.msra.mxu0 0.0
    %722 = vmatprep.subr.mxu0 0.0
    %723 = vmatpush1.msra.mxu0 0.0
    %724 = vmatprep.mubr.f32.mxu0 0.0
    %725 = vmatmul.mubr.f32.gmra.mrb[0].mxu0 %v658
    %v726 = vpop.f32.mrb[0].mxu0
    %v727 = vadd.f32 0.0, %v726
    %v728 = vpop.f32.mrb[0].mxu0
    %729 = vdwg.mxu0
    %v731 = vsel %vm583, %v577, 0
    %733 = vmatprep.subr.mxu0 0.0
    %734 = vmatpush1.msra.mxu0 %v25
    %735 = vmatprep.subr.mxu0 0.0
    %736 = vmatpush1.msra.mxu0 0.0
    %737 = vmatprep.subr.mxu0 0.0
    %738 = vmatpush1.msra.mxu0 0.0
    %739 = vmatprep.subr.mxu0 0.0
    %740 = vmatpush1.msra.mxu0 0.0
    %741 = vmatprep.subr.mxu0 0.0
    %742 = vmatpush1.msra.mxu0 0.0
    %743 = vmatprep.subr.mxu0 0.0
    %744 = vmatpush1.msra.mxu0 0.0
    %745 = vmatprep.subr.mxu0 0.0
    %746 = vmatpush1.msra.mxu0 0.0
    %747 = vmatprep.subr.mxu0 0.0
    %748 = vmatpush1.msra.mxu0 0.0
    %749 = vmatprep.subr.mxu0 0.0
    %750 = vmatpush1.msra.mxu0 0.0
    %751 = vmatprep.subr.mxu0 0.0
    %752 = vmatpush1.msra.mxu0 0.0
    %753 = vmatprep.subr.mxu0 0.0
    %754 = vmatpush1.msra.mxu0 0.0
    %755 = vmatprep.subr.mxu0 0.0
    %756 = vmatpush1.msra.mxu0 0.0
    %757 = vmatprep.subr.mxu0 0.0
    %758 = vmatpush1.msra.mxu0 0.0
    %759 = vmatprep.subr.mxu0 0.0
    %760 = vmatpush1.msra.mxu0 0.0
    %761 = vmatprep.subr.mxu0 0.0
    %762 = vmatpush1.msra.mxu0 0.0
    %763 = vmatprep.subr.mxu0 0.0
    %764 = vmatpush1.msra.mxu0 0.0
    %765 = vmatprep.subr.mxu0 0.0
    %766 = vmatpush1.msra.mxu0 0.0
    %767 = vmatprep.subr.mxu0 0.0
    %768 = vmatpush1.msra.mxu0 0.0
    %769 = vmatprep.subr.mxu0 0.0
    %770 = vmatpush1.msra.mxu0 0.0
    %771 = vmatprep.subr.mxu0 0.0
    %772 = vmatpush1.msra.mxu0 0.0
    %773 = vmatprep.subr.mxu0 0.0
    %774 = vmatpush1.msra.mxu0 0.0
    %775 = vmatprep.subr.mxu0 0.0
    %776 = vmatpush1.msra.mxu0 0.0
    %777 = vmatprep.subr.mxu0 0.0
    %778 = vmatpush1.msra.mxu0 0.0
    %779 = vmatprep.subr.mxu0 0.0
    %780 = vmatpush1.msra.mxu0 0.0
    %781 = vmatprep.subr.mxu0 0.0
    %782 = vmatpush1.msra.mxu0 0.0
    %783 = vmatprep.subr.mxu0 0.0
    %784 = vmatpush1.msra.mxu0 0.0
    %785 = vmatprep.subr.mxu0 0.0
    %786 = vmatpush1.msra.mxu0 0.0
    %787 = vmatprep.subr.mxu0 0.0
    %788 = vmatpush1.msra.mxu0 0.0
    %789 = vmatprep.subr.mxu0 0.0
    %790 = vmatpush1.msra.mxu0 0.0
    %791 = vmatprep.subr.mxu0 0.0
    %792 = vmatpush1.msra.mxu0 0.0
    %793 = vmatprep.subr.mxu0 0.0
    %794 = vmatpush1.msra.mxu0 0.0
    %795 = vmatprep.subr.mxu0 0.0
    %796 = vmatpush1.msra.mxu0 0.0
    %797 = vmatprep.mubr.f32.mxu0 0.0
    %798 = vmatmul.mubr.f32.gmra.mrb[0].mxu0 %v731
    %v799 = vpop.f32.mrb[0].mxu0
    %v800 = vadd.f32 0.0, %v799
    %v801 = vpop.f32.mrb[0].mxu0
    %802 = vdwg.mxu0
    %v804 = vsel %vm583, %v578, 0
    %806 = vmatprep.subr.mxu0 0.0
    %807 = vmatpush1.msra.mxu0 %v26
    %808 = vmatprep.subr.mxu0 0.0
    %809 = vmatpush1.msra.mxu0 0.0
    %810 = vmatprep.subr.mxu0 0.0
    %811 = vmatpush1.msra.mxu0 0.0
    %812 = vmatprep.subr.mxu0 0.0
    %813 = vmatpush1.msra.mxu0 0.0
    %814 = vmatprep.subr.mxu0 0.0
    %815 = vmatpush1.msra.mxu0 0.0
    %816 = vmatprep.subr.mxu0 0.0
    %817 = vmatpush1.msra.mxu0 0.0
    %818 = vmatprep.subr.mxu0 0.0
    %819 = vmatpush1.msra.mxu0 0.0
    %820 = vmatprep.subr.mxu0 0.0
    %821 = vmatpush1.msra.mxu0 0.0
    %822 = vmatprep.subr.mxu0 0.0
    %823 = vmatpush1.msra.mxu0 0.0
    %824 = vmatprep.subr.mxu0 0.0
    %825 = vmatpush1.msra.mxu0 0.0
    %826 = vmatprep.subr.mxu0 0.0
    %827 = vmatpush1.msra.mxu0 0.0
    %828 = vmatprep.subr.mxu0 0.0
    %829 = vmatpush1.msra.mxu0 0.0
    %830 = vmatprep.subr.mxu0 0.0
    %831 = vmatpush1.msra.mxu0 0.0
    %832 = vmatprep.subr.mxu0 0.0
    %833 = vmatpush1.msra.mxu0 0.0
    %834 = vmatprep.subr.mxu0 0.0
    %835 = vmatpush1.msra.mxu0 0.0
    %836 = vmatprep.subr.mxu0 0.0
    %837 = vmatpush1.msra.mxu0 0.0
    %838 = vmatprep.subr.mxu0 0.0
    %839 = vmatpush1.msra.mxu0 0.0
    %840 = vmatprep.subr.mxu0 0.0
    %841 = vmatpush1.msra.mxu0 0.0
    %842 = vmatprep.subr.mxu0 0.0
    %843 = vmatpush1.msra.mxu0 0.0
    %844 = vmatprep.subr.mxu0 0.0
    %845 = vmatpush1.msra.mxu0 0.0
    %846 = vmatprep.subr.mxu0 0.0
    %847 = vmatpush1.msra.mxu0 0.0
    %848 = vmatprep.subr.mxu0 0.0
    %849 = vmatpush1.msra.mxu0 0.0
    %850 = vmatprep.subr.mxu0 0.0
    %851 = vmatpush1.msra.mxu0 0.0
    %852 = vmatprep.subr.mxu0 0.0
    %853 = vmatpush1.msra.mxu0 0.0
    %854 = vmatprep.subr.mxu0 0.0
    %855 = vmatpush1.msra.mxu0 0.0
    %856 = vmatprep.subr.mxu0 0.0
    %857 = vmatpush1.msra.mxu0 0.0
    %858 = vmatprep.subr.mxu0 0.0
    %859 = vmatpush1.msra.mxu0 0.0
    %860 = vmatprep.subr.mxu0 0.0
    %861 = vmatpush1.msra.mxu0 0.0
    %862 = vmatprep.subr.mxu0 0.0
    %863 = vmatpush1.msra.mxu0 0.0
    %864 = vmatprep.subr.mxu0 0.0
    %865 = vmatpush1.msra.mxu0 0.0
    %866 = vmatprep.subr.mxu0 0.0
    %867 = vmatpush1.msra.mxu0 0.0
    %868 = vmatprep.subr.mxu0 0.0
    %869 = vmatpush1.msra.mxu0 0.0
    %870 = vmatprep.mubr.f32.mxu0 0.0
    %871 = vmatmul.mubr.f32.gmra.mrb[0].mxu0 %v804
    %v872 = vpop.f32.mrb[0].mxu0
    %v873 = vadd.f32 0.0, %v872
    %v874 = vpop.f32.mrb[0].mxu0
    %875 = vdwg.mxu0
    %v877 = vsel %vm583, %v579, 0
    %879 = vmatprep.subr.mxu0 0.0
    %880 = vmatpush1.msra.mxu0 %v27
    %881 = vmatprep.subr.mxu0 0.0
    %882 = vmatpush1.msra.mxu0 0.0
    %883 = vmatprep.subr.mxu0 0.0
    %884 = vmatpush1.msra.mxu0 0.0
    %885 = vmatprep.subr.mxu0 0.0
    %886 = vmatpush1.msra.mxu0 0.0
    %887 = vmatprep.subr.mxu0 0.0
    %888 = vmatpush1.msra.mxu0 0.0
    %889 = vmatprep.subr.mxu0 0.0
    %890 = vmatpush1.msra.mxu0 0.0
    %891 = vmatprep.subr.mxu0 0.0
    %892 = vmatpush1.msra.mxu0 0.0
    %893 = vmatprep.subr.mxu0 0.0
    %894 = vmatpush1.msra.mxu0 0.0
    %895 = vmatprep.subr.mxu0 0.0
    %896 = vmatpush1.msra.mxu0 0.0
    %897 = vmatprep.subr.mxu0 0.0
    %898 = vmatpush1.msra.mxu0 0.0
    %899 = vmatprep.subr.mxu0 0.0
    %900 = vmatpush1.msra.mxu0 0.0
    %901 = vmatprep.subr.mxu0 0.0
    %902 = vmatpush1.msra.mxu0 0.0
    %903 = vmatprep.subr.mxu0 0.0
    %904 = vmatpush1.msra.mxu0 0.0
    %905 = vmatprep.subr.mxu0 0.0
    %906 = vmatpush1.msra.mxu0 0.0
    %907 = vmatprep.subr.mxu0 0.0
    %908 = vmatpush1.msra.mxu0 0.0
    %909 = vmatprep.subr.mxu0 0.0
    %910 = vmatpush1.msra.mxu0 0.0
    %911 = vmatprep.subr.mxu0 0.0
    %912 = vmatpush1.msra.mxu0 0.0
    %913 = vmatprep.subr.mxu0 0.0
    %914 = vmatpush1.msra.mxu0 0.0
    %915 = vmatprep.subr.mxu0 0.0
    %916 = vmatpush1.msra.mxu0 0.0
    %917 = vmatprep.subr.mxu0 0.0
    %918 = vmatpush1.msra.mxu0 0.0
    %919 = vmatprep.subr.mxu0 0.0
    %920 = vmatpush1.msra.mxu0 0.0
    %921 = vmatprep.subr.mxu0 0.0
    %922 = vmatpush1.msra.mxu0 0.0
    %923 = vmatprep.subr.mxu0 0.0
    %924 = vmatpush1.msra.mxu0 0.0
    %925 = vmatprep.subr.mxu0 0.0
    %926 = vmatpush1.msra.mxu0 0.0
    %927 = vmatprep.subr.mxu0 0.0
    %928 = vmatpush1.msra.mxu0 0.0
    %929 = vmatprep.subr.mxu0 0.0
    %930 = vmatpush1.msra.mxu0 0.0
    %931 = vmatprep.subr.mxu0 0.0
    %932 = vmatpush1.msra.mxu0 0.0
    %933 = vmatprep.subr.mxu0 0.0
    %934 = vmatpush1.msra.mxu0 0.0
    %935 = vmatprep.subr.mxu0 0.0
    %936 = vmatpush1.msra.mxu0 0.0
    %937 = vmatprep.subr.mxu0 0.0
    %938 = vmatpush1.msra.mxu0 0.0
    %939 = vmatprep.subr.mxu0 0.0
    %940 = vmatpush1.msra.mxu0 0.0
    %941 = vmatprep.subr.mxu0 0.0
    %942 = vmatpush1.msra.mxu0 0.0
    %943 = vmatprep.mubr.f32.mxu0 0.0
    %944 = vmatmul.mubr.f32.gmra.mrb[0].mxu0 %v877
    %v945 = vpop.f32.mrb[0].mxu0
    %v946 = vadd.f32 0.0, %v945
    %v947 = vpop.f32.mrb[0].mxu0
    %948 = vdwg.mxu0
    %v950 = vsel %vm583, %v580, 0
    %952 = vmatprep.subr.mxu0 0.0
    %953 = vmatpush1.msra.mxu0 %v28
    %954 = vmatprep.subr.mxu0 0.0
    %955 = vmatpush1.msra.mxu0 0.0
    %956 = vmatprep.subr.mxu0 0.0
    %957 = vmatpush1.msra.mxu0 0.0
    %958 = vmatprep.subr.mxu0 0.0
    %959 = vmatpush1.msra.mxu0 0.0
    %960 = vmatprep.subr.mxu0 0.0
    %961 = vmatpush1.msra.mxu0 0.0
    %962 = vmatprep.subr.mxu0 0.0
    %963 = vmatpush1.msra.mxu0 0.0
    %964 = vmatprep.subr.mxu0 0.0
    %965 = vmatpush1.msra.mxu0 0.0
    %966 = vmatprep.subr.mxu0 0.0
    %967 = vmatpush1.msra.mxu0 0.0
    %968 = vmatprep.subr.mxu0 0.0
    %969 = vmatpush1.msra.mxu0 0.0
    %970 = vmatprep.subr.mxu0 0.0
    %971 = vmatpush1.msra.mxu0 0.0
    %972 = vmatprep.subr.mxu0 0.0
    %973 = vmatpush1.msra.mxu0 0.0
    %974 = vmatprep.subr.mxu0 0.0
    %975 = vmatpush1.msra.mxu0 0.0
    %976 = vmatprep.subr.mxu0 0.0
    %977 = vmatpush1.msra.mxu0 0.0
    %978 = vmatprep.subr.mxu0 0.0
    %979 = vmatpush1.msra.mxu0 0.0
    %980 = vmatprep.subr.mxu0 0.0
    %981 = vmatpush1.msra.mxu0 0.0
    %982 = vmatprep.subr.mxu0 0.0
    %983 = vmatpush1.msra.mxu0 0.0
    %984 = vmatprep.subr.mxu0 0.0
    %985 = vmatpush1.msra.mxu0 0.0
    %986 = vmatprep.subr.mxu0 0.0
    %987 = vmatpush1.msra.mxu0 0.0
    %988 = vmatprep.subr.mxu0 0.0
    %989 = vmatpush1.msra.mxu0 0.0
    %990 = vmatprep.subr.mxu0 0.0
    %991 = vmatpush1.msra.mxu0 0.0
    %992 = vmatprep.subr.mxu0 0.0
    %993 = vmatpush1.msra.mxu0 0.0
    %994 = vmatprep.subr.mxu0 0.0
    %995 = vmatpush1.msra.mxu0 0.0
    %996 = vmatprep.subr.mxu0 0.0
    %997 = vmatpush1.msra.mxu0 0.0
    %998 = vmatprep.subr.mxu0 0.0
    %999 = vmatpush1.msra.mxu0 0.0
    %1000 = vmatprep.subr.mxu0 0.0
    %1001 = vmatpush1.msra.mxu0 0.0
    %1002 = vmatprep.subr.mxu0 0.0
    %1003 = vmatpush1.msra.mxu0 0.0
    %1004 = vmatprep.subr.mxu0 0.0
    %1005 = vmatpush1.msra.mxu0 0.0
    %1006 = vmatprep.subr.mxu0 0.0
    %1007 = vmatpush1.msra.mxu0 0.0
    %1008 = vmatprep.subr.mxu0 0.0
    %1009 = vmatpush1.msra.mxu0 0.0
    %1010 = vmatprep.subr.mxu0 0.0
    %1011 = vmatpush1.msra.mxu0 0.0
    %1012 = vmatprep.subr.mxu0 0.0
    %1013 = vmatpush1.msra.mxu0 0.0
    %1014 = vmatprep.subr.mxu0 0.0
    %1015 = vmatpush1.msra.mxu0 0.0
    %1016 = vmatprep.mubr.f32.mxu0 0.0
    %1017 = vmatmul.mubr.f32.gmra.mrb[0].mxu0 %v950
    %v1018 = vpop.f32.mrb[0].mxu0
    %v1019 = vadd.f32 0.0, %v1018
    %v1020 = vpop.f32.mrb[0].mxu0
    %1021 = vdwg.mxu0
    %v1023 = vsel %vm583, %v581, 0
    %1025 = vmatprep.subr.mxu0 0.0
    %1026 = vmatpush1.msra.mxu0 %v29
    %1027 = vmatprep.subr.mxu0 0.0
    %1028 = vmatpush1.msra.mxu0 0.0
    %1029 = vmatprep.subr.mxu0 0.0
    %1030 = vmatpush1.msra.mxu0 0.0
    %1031 = vmatprep.subr.mxu0 0.0
    %1032 = vmatpush1.msra.mxu0 0.0
    %1033 = vmatprep.subr.mxu0 0.0
    %1034 = vmatpush1.msra.mxu0 0.0
    %1035 = vmatprep.subr.mxu0 0.0
    %1036 = vmatpush1.msra.mxu0 0.0
    %1037 = vmatprep.subr.mxu0 0.0
    %1038 = vmatpush1.msra.mxu0 0.0
    %1039 = vmatprep.subr.mxu0 0.0
    %1040 = vmatpush1.msra.mxu0 0.0
    %1041 = vmatprep.subr.mxu0 0.0
    %1042 = vmatpush1.msra.mxu0 0.0
    %1043 = vmatprep.subr.mxu0 0.0
    %1044 = vmatpush1.msra.mxu0 0.0
    %1045 = vmatprep.subr.mxu0 0.0
    %1046 = vmatpush1.msra.mxu0 0.0
    %1047 = vmatprep.subr.mxu0 0.0
    %1048 = vmatpush1.msra.mxu0 0.0
    %1049 = vmatprep.subr.mxu0 0.0
    %1050 = vmatpush1.msra.mxu0 0.0
    %1051 = vmatprep.subr.mxu0 0.0
    %1052 = vmatpush1.msra.mxu0 0.0
    %1053 = vmatprep.subr.mxu0 0.0
    %1054 = vmatpush1.msra.mxu0 0.0
    %1055 = vmatprep.subr.mxu0 0.0
    %1056 = vmatpush1.msra.mxu0 0.0
    %1057 = vmatprep.subr.mxu0 0.0
    %1058 = vmatpush1.msra.mxu0 0.0
    %1059 = vmatprep.subr.mxu0 0.0
    %1060 = vmatpush1.msra.mxu0 0.0
    %1061 = vmatprep.subr.mxu0 0.0
    %1062 = vmatpush1.msra.mxu0 0.0
    %1063 = vmatprep.subr.mxu0 0.0
    %1064 = vmatpush1.msra.mxu0 0.0
    %1065 = vmatprep.subr.mxu0 0.0
    %1066 = vmatpush1.msra.mxu0 0.0
    %1067 = vmatprep.subr.mxu0 0.0
    %1068 = vmatpush1.msra.mxu0 0.0
    %1069 = vmatprep.subr.mxu0 0.0
    %1070 = vmatpush1.msra.mxu0 0.0
    %1071 = vmatprep.subr.mxu0 0.0
    %1072 = vmatpush1.msra.mxu0 0.0
    %1073 = vmatprep.subr.mxu0 0.0
    %1074 = vmatpush1.msra.mxu0 0.0
    %1075 = vmatprep.subr.mxu0 0.0
    %1076 = vmatpush1.msra.mxu0 0.0
    %1077 = vmatprep.subr.mxu0 0.0
    %1078 = vmatpush1.msra.mxu0 0.0
    %1079 = vmatprep.subr.mxu0 0.0
    %1080 = vmatpush1.msra.mxu0 0.0
    %1081 = vmatprep.subr.mxu0 0.0
    %1082 = vmatpush1.msra.mxu0 0.0
    %1083 = vmatprep.subr.mxu0 0.0
    %1084 = vmatpush1.msra.mxu0 0.0
    %1085 = vmatprep.subr.mxu0 0.0
    %1086 = vmatpush1.msra.mxu0 0.0
    %1087 = vmatprep.subr.mxu0 0.0
    %1088 = vmatpush1.msra.mxu0 0.0
    %1089 = vmatprep.mubr.f32.mxu0 0.0
    %1090 = vmatmul.mubr.f32.gmra.mrb[0].mxu0 %v1023
    %v1091 = vpop.f32.mrb[0].mxu0
    %v1092 = vadd.f32 0.0, %v1091
    %v1093 = vpop.f32.mrb[0].mxu0
    %1094 = vdwg.mxu0
    %v1096 = vsel %vm583, %v582, 0
    %1098 = vmatprep.subr.mxu0 0.0
    %1099 = vmatpush1.msra.mxu0 %v30
    %1100 = vmatprep.subr.mxu0 0.0
    %1101 = vmatpush1.msra.mxu0 0.0
    %1102 = vmatprep.subr.mxu0 0.0
    %1103 = vmatpush1.msra.mxu0 0.0
    %1104 = vmatprep.subr.mxu0 0.0
    %1105 = vmatpush1.msra.mxu0 0.0
    %1106 = vmatprep.subr.mxu0 0.0
    %1107 = vmatpush1.msra.mxu0 0.0
    %1108 = vmatprep.subr.mxu0 0.0
    %1109 = vmatpush1.msra.mxu0 0.0
    %1110 = vmatprep.subr.mxu0 0.0
    %1111 = vmatpush1.msra.mxu0 0.0
    %1112 = vmatprep.subr.mxu0 0.0
    %1113 = vmatpush1.msra.mxu0 0.0
    %1114 = vmatprep.subr.mxu0 0.0
    %1115 = vmatpush1.msra.mxu0 0.0
    %1116 = vmatprep.subr.mxu0 0.0
    %1117 = vmatpush1.msra.mxu0 0.0
    %1118 = vmatprep.subr.mxu0 0.0
    %1119 = vmatpush1.msra.mxu0 0.0
    %1120 = vmatprep.subr.mxu0 0.0
    %1121 = vmatpush1.msra.mxu0 0.0
    %1122 = vmatprep.subr.mxu0 0.0
    %1123 = vmatpush1.msra.mxu0 0.0
    %1124 = vmatprep.subr.mxu0 0.0
    %1125 = vmatpush1.msra.mxu0 0.0
    %1126 = vmatprep.subr.mxu0 0.0
    %1127 = vmatpush1.msra.mxu0 0.0
    %1128 = vmatprep.subr.mxu0 0.0
    %1129 = vmatpush1.msra.mxu0 0.0
    %1130 = vmatprep.subr.mxu0 0.0
    %1131 = vmatpush1.msra.mxu0 0.0
    %1132 = vmatprep.subr.mxu0 0.0
    %1133 = vmatpush1.msra.mxu0 0.0
    %1134 = vmatprep.subr.mxu0 0.0
    %1135 = vmatpush1.msra.mxu0 0.0
    %1136 = vmatprep.subr.mxu0 0.0
    %1137 = vmatpush1.msra.mxu0 0.0
    %1138 = vmatprep.subr.mxu0 0.0
    %1139 = vmatpush1.msra.mxu0 0.0
    %1140 = vmatprep.subr.mxu0 0.0
    %1141 = vmatpush1.msra.mxu0 0.0
    %1142 = vmatprep.subr.mxu0 0.0
    %1143 = vmatpush1.msra.mxu0 0.0
    %1144 = vmatprep.subr.mxu0 0.0
    %1145 = vmatpush1.msra.mxu0 0.0
    %1146 = vmatprep.subr.mxu0 0.0
    %1147 = vmatpush1.msra.mxu0 0.0
    %1148 = vmatprep.subr.mxu0 0.0
    %1149 = vmatpush1.msra.mxu0 0.0
    %1150 = vmatprep.subr.mxu0 0.0
    %1151 = vmatpush1.msra.mxu0 0.0
    %1152 = vmatprep.subr.mxu0 0.0
    %1153 = vmatpush1.msra.mxu0 0.0
    %1154 = vmatprep.subr.mxu0 0.0
    %1155 = vmatpush1.msra.mxu0 0.0
    %1156 = vmatprep.subr.mxu0 0.0
    %1157 = vmatpush1.msra.mxu0 0.0
    %1158 = vmatprep.subr.mxu0 0.0
    %1159 = vmatpush1.msra.mxu0 0.0
    %1160 = vmatprep.subr.mxu0 0.0
    %1161 = vmatpush1.msra.mxu0 0.0
    %1162 = vmatprep.mubr.f32.mxu0 0.0
    %1163 = vmatmul.mubr.f32.gmra.mrb[0].mxu0 %v1096
    %v1164 = vpop.f32.mrb[0].mxu0
    %v1165 = vadd.f32 0.0, %v1164
    %v1166 = vpop.f32.mrb[0].mxu0
    %1167 = vdwg.mxu0
    %v1169 = vsel %vm583, %v23, 0
    %1171 = vmatprep.subr.mxu0 0.0
    %1172 = vmatpush1.msra.mxu0 %v575
    %1173 = vmatprep.subr.mxu0 0.0
    %1174 = vmatpush1.msra.mxu0 0.0
    %1175 = vmatprep.subr.mxu0 0.0
    %1176 = vmatpush1.msra.mxu0 0.0
    %1177 = vmatprep.subr.mxu0 0.0
    %1178 = vmatpush1.msra.mxu0 0.0
    %1179 = vmatprep.subr.mxu0 0.0
    %1180 = vmatpush1.msra.mxu0 0.0
    %1181 = vmatprep.subr.mxu0 0.0
    %1182 = vmatpush1.msra.mxu0 0.0
    %1183 = vmatprep.subr.mxu0 0.0
    %1184 = vmatpush1.msra.mxu0 0.0
    %1185 = vmatprep.subr.mxu0 0.0
    %1186 = vmatpush1.msra.mxu0 0.0
    %1187 = vmatprep.subr.mxu0 0.0
    %1188 = vmatpush1.msra.mxu0 0.0
    %1189 = vmatprep.subr.mxu0 0.0
    %1190 = vmatpush1.msra.mxu0 0.0
    %1191 = vmatprep.subr.mxu0 0.0
    %1192 = vmatpush1.msra.mxu0 0.0
    %1193 = vmatprep.subr.mxu0 0.0
    %1194 = vmatpush1.msra.mxu0 0.0
    %1195 = vmatprep.subr.mxu0 0.0
    %1196 = vmatpush1.msra.mxu0 0.0
    %1197 = vmatprep.subr.mxu0 0.0
    %1198 = vmatpush1.msra.mxu0 0.0
    %1199 = vmatprep.subr.mxu0 0.0
    %1200 = vmatpush1.msra.mxu0 0.0
    %1201 = vmatprep.subr.mxu0 0.0
    %1202 = vmatpush1.msra.mxu0 0.0
    %1203 = vmatprep.subr.mxu0 0.0
    %1204 = vmatpush1.msra.mxu0 0.0
    %1205 = vmatprep.subr.mxu0 0.0
    %1206 = vmatpush1.msra.mxu0 0.0
    %1207 = vmatprep.subr.mxu0 0.0
    %1208 = vmatpush1.msra.mxu0 0.0
    %1209 = vmatprep.subr.mxu0 0.0
    %1210 = vmatpush1.msra.mxu0 0.0
    %1211 = vmatprep.subr.mxu0 0.0
    %1212 = vmatpush1.msra.mxu0 0.0
    %1213 = vmatprep.subr.mxu0 0.0
    %1214 = vmatpush1.msra.mxu0 0.0
    %1215 = vmatprep.subr.mxu0 0.0
    %1216 = vmatpush1.msra.mxu0 0.0
    %1217 = vmatprep.subr.mxu0 0.0
    %1218 = vmatpush1.msra.mxu0 0.0
    %1219 = vmatprep.subr.mxu0 0.0
    %1220 = vmatpush1.msra.mxu0 0.0
    %1221 = vmatprep.subr.mxu0 0.0
    %1222 = vmatpush1.msra.mxu0 0.0
    %1223 = vmatprep.subr.mxu0 0.0
    %1224 = vmatpush1.msra.mxu0 0.0
    %1225 = vmatprep.subr.mxu0 0.0
    %1226 = vmatpush1.msra.mxu0 0.0
    %1227 = vmatprep.subr.mxu0 0.0
    %1228 = vmatpush1.msra.mxu0 0.0
    %1229 = vmatprep.subr.mxu0 0.0
    %1230 = vmatpush1.msra.mxu0 0.0
    %1231 = vmatprep.subr.mxu0 0.0
    %1232 = vmatpush1.msra.mxu0 0.0
    %1233 = vmatprep.subr.mxu0 0.0
    %1234 = vmatpush1.msra.mxu0 0.0
    %1235 = vmatprep.mubr.f32.mxu0 0.0
    %1236 = vmatmul.mubr.f32.gmra.mrb[0].mxu0 %v1169
    %v1237 = vpop.f32.mrb[0].mxu0
    %v1238 = vadd.f32 %v654, %v1237
    %v1239 = vpop.f32.mrb[0].mxu0
    %1240 = vdwg.mxu0
    %v1242 = vsel %vm583, %v24, 0
    %1244 = vmatprep.subr.mxu0 0.0
    %1245 = vmatpush1.msra.mxu0 %v576
    %1246 = vmatprep.subr.mxu0 0.0
    %1247 = vmatpush1.msra.mxu0 0.0
    %1248 = vmatprep.subr.mxu0 0.0
    %1249 = vmatpush1.msra.mxu0 0.0
    %1250 = vmatprep.subr.mxu0 0.0
    %1251 = vmatpush1.msra.mxu0 0.0
    %1252 = vmatprep.subr.mxu0 0.0
    %1253 = vmatpush1.msra.mxu0 0.0
    %1254 = vmatprep.subr.mxu0 0.0
    %1255 = vmatpush1.msra.mxu0 0.0
    %1256 = vmatprep.subr.mxu0 0.0
    %1257 = vmatpush1.msra.mxu0 0.0
    %1258 = vmatprep.subr.mxu0 0.0
    %1259 = vmatpush1.msra.mxu0 0.0
    %1260 = vmatprep.subr.mxu0 0.0
    %1261 = vmatpush1.msra.mxu0 0.0
    %1262 = vmatprep.subr.mxu0 0.0
    %1263 = vmatpush1.msra.mxu0 0.0
    %1264 = vmatprep.subr.mxu0 0.0
    %1265 = vmatpush1.msra.mxu0 0.0
    %1266 = vmatprep.subr.mxu0 0.0
    %1267 = vmatpush1.msra.mxu0 0.0
    %1268 = vmatprep.subr.mxu0 0.0
    %1269 = vmatpush1.msra.mxu0 0.0
    %1270 = vmatprep.subr.mxu0 0.0
    %1271 = vmatpush1.msra.mxu0 0.0
    %1272 = vmatprep.subr.mxu0 0.0
    %1273 = vmatpush1.msra.mxu0 0.0
    %1274 = vmatprep.subr.mxu0 0.0
    %1275 = vmatpush1.msra.mxu0 0.0
    %1276 = vmatprep.subr.mxu0 0.0
    %1277 = vmatpush1.msra.mxu0 0.0
    %1278 = vmatprep.subr.mxu0 0.0
    %1279 = vmatpush1.msra.mxu0 0.0
    %1280 = vmatprep.subr.mxu0 0.0
    %1281 = vmatpush1.msra.mxu0 0.0
    %1282 = vmatprep.subr.mxu0 0.0
    %1283 = vmatpush1.msra.mxu0 0.0
    %1284 = vmatprep.subr.mxu0 0.0
    %1285 = vmatpush1.msra.mxu0 0.0
    %1286 = vmatprep.subr.mxu0 0.0
    %1287 = vmatpush1.msra.mxu0 0.0
    %1288 = vmatprep.subr.mxu0 0.0
    %1289 = vmatpush1.msra.mxu0 0.0
    %1290 = vmatprep.subr.mxu0 0.0
    %1291 = vmatpush1.msra.mxu0 0.0
    %1292 = vmatprep.subr.mxu0 0.0
    %1293 = vmatpush1.msra.mxu0 0.0
    %1294 = vmatprep.subr.mxu0 0.0
    %1295 = vmatpush1.msra.mxu0 0.0
    %1296 = vmatprep.subr.mxu0 0.0
    %1297 = vmatpush1.msra.mxu0 0.0
    %1298 = vmatprep.subr.mxu0 0.0
    %1299 = vmatpush1.msra.mxu0 0.0
    %1300 = vmatprep.subr.mxu0 0.0
    %1301 = vmatpush1.msra.mxu0 0.0
    %1302 = vmatprep.subr.mxu0 0.0
    %1303 = vmatpush1.msra.mxu0 0.0
    %1304 = vmatprep.subr.mxu0 0.0
    %1305 = vmatpush1.msra.mxu0 0.0
    %1306 = vmatprep.subr.mxu0 0.0
    %1307 = vmatpush1.msra.mxu0 0.0
    %1308 = vmatprep.mubr.f32.mxu0 0.0
    %1309 = vmatmul.mubr.f32.gmra.mrb[0].mxu0 %v1242
    %v1310 = vpop.f32.mrb[0].mxu0
    %v1311 = vadd.f32 %v727, %v1310
    %v1312 = vpop.f32.mrb[0].mxu0
    %1313 = vdwg.mxu0
    %v1315 = vsel %vm583, %v25, 0
    %1317 = vmatprep.subr.mxu0 0.0
    %1318 = vmatpush1.msra.mxu0 %v577
    %1319 = vmatprep.subr.mxu0 0.0
    %1320 = vmatpush1.msra.mxu0 0.0
    %1321 = vmatprep.subr.mxu0 0.0
    %1322 = vmatpush1.msra.mxu0 0.0
    %1323 = vmatprep.subr.mxu0 0.0
    %1324 = vmatpush1.msra.mxu0 0.0
    %1325 = vmatprep.subr.mxu0 0.0
    %1326 = vmatpush1.msra.mxu0 0.0
    %1327 = vmatprep.subr.mxu0 0.0
    %1328 = vmatpush1.msra.mxu0 0.0
    %1329 = vmatprep.subr.mxu0 0.0
    %1330 = vmatpush1.msra.mxu0 0.0
    %1331 = vmatprep.subr.mxu0 0.0
    %1332 = vmatpush1.msra.mxu0 0.0
    %1333 = vmatprep.subr.mxu0 0.0
    %1334 = vmatpush1.msra.mxu0 0.0
    %1335 = vmatprep.subr.mxu0 0.0
    %1336 = vmatpush1.msra.mxu0 0.0
    %1337 = vmatprep.subr.mxu0 0.0
    %1338 = vmatpush1.msra.mxu0 0.0
    %1339 = vmatprep.subr.mxu0 0.0
    %1340 = vmatpush1.msra.mxu0 0.0
    %1341 = vmatprep.subr.mxu0 0.0
    %1342 = vmatpush1.msra.mxu0 0.0
    %1343 = vmatprep.subr.mxu0 0.0
    %1344 = vmatpush1.msra.mxu0 0.0
    %1345 = vmatprep.subr.mxu0 0.0
    %1346 = vmatpush1.msra.mxu0 0.0
    %1347 = vmatprep.subr.mxu0 0.0
    %1348 = vmatpush1.msra.mxu0 0.0
    %1349 = vmatprep.subr.mxu0 0.0
    %1350 = vmatpush1.msra.mxu0 0.0
    %1351 = vmatprep.subr.mxu0 0.0
    %1352 = vmatpush1.msra.mxu0 0.0
    %1353 = vmatprep.subr.mxu0 0.0
    %1354 = vmatpush1.msra.mxu0 0.0
    %1355 = vmatprep.subr.mxu0 0.0
    %1356 = vmatpush1.msra.mxu0 0.0
    %1357 = vmatprep.subr.mxu0 0.0
    %1358 = vmatpush1.msra.mxu0 0.0
    %1359 = vmatprep.subr.mxu0 0.0
    %1360 = vmatpush1.msra.mxu0 0.0
    %1361 = vmatprep.subr.mxu0 0.0
    %1362 = vmatpush1.msra.mxu0 0.0
    %1363 = vmatprep.subr.mxu0 0.0
    %1364 = vmatpush1.msra.mxu0 0.0
    %1365 = vmatprep.subr.mxu0 0.0
    %1366 = vmatpush1.msra.mxu0 0.0
    %1367 = vmatprep.subr.mxu0 0.0
    %1368 = vmatpush1.msra.mxu0 0.0
    %1369 = vmatprep.subr.mxu0 0.0
    %1370 = vmatpush1.msra.mxu0 0.0
    %1371 = vmatprep.subr.mxu0 0.0
    %1372 = vmatpush1.msra.mxu0 0.0
    %1373 = vmatprep.subr.mxu0 0.0
    %1374 = vmatpush1.msra.mxu0 0.0
    %1375 = vmatprep.subr.mxu0 0.0
    %1376 = vmatpush1.msra.mxu0 0.0
    %1377 = vmatprep.subr.mxu0 0.0
    %1378 = vmatpush1.msra.mxu0 0.0
    %1379 = vmatprep.subr.mxu0 0.0
    %1380 = vmatpush1.msra.mxu0 0.0
    %1381 = vmatprep.mubr.f32.mxu0 0.0
    %1382 = vmatmul.mubr.f32.gmra.mrb[0].mxu0 %v1315
    %v1383 = vpop.f32.mrb[0].mxu0
    %v1384 = vadd.f32 %v800, %v1383
    %v1385 = vpop.f32.mrb[0].mxu0
    %1386 = vdwg.mxu0
    %v1388 = vsel %vm583, %v26, 0
    %1390 = vmatprep.subr.mxu0 0.0
    %1391 = vmatpush1.msra.mxu0 %v578
    %1392 = vmatprep.subr.mxu0 0.0
    %1393 = vmatpush1.msra.mxu0 0.0
    %1394 = vmatprep.subr.mxu0 0.0
    %1395 = vmatpush1.msra.mxu0 0.0
    %1396 = vmatprep.subr.mxu0 0.0
    %1397 = vmatpush1.msra.mxu0 0.0
    %1398 = vmatprep.subr.mxu0 0.0
    %1399 = vmatpush1.msra.mxu0 0.0
    %1400 = vmatprep.subr.mxu0 0.0
    %1401 = vmatpush1.msra.mxu0 0.0
    %1402 = vmatprep.subr.mxu0 0.0
    %1403 = vmatpush1.msra.mxu0 0.0
    %1404 = vmatprep.subr.mxu0 0.0
    %1405 = vmatpush1.msra.mxu0 0.0
    %1406 = vmatprep.subr.mxu0 0.0
    %1407 = vmatpush1.msra.mxu0 0.0
    %1408 = vmatprep.subr.mxu0 0.0
    %1409 = vmatpush1.msra.mxu0 0.0
    %1410 = vmatprep.subr.mxu0 0.0
    %1411 = vmatpush1.msra.mxu0 0.0
    %1412 = vmatprep.subr.mxu0 0.0
    %1413 = vmatpush1.msra.mxu0 0.0
    %1414 = vmatprep.subr.mxu0 0.0
    %1415 = vmatpush1.msra.mxu0 0.0
    %1416 = vmatprep.subr.mxu0 0.0
    %1417 = vmatpush1.msra.mxu0 0.0
    %1418 = vmatprep.subr.mxu0 0.0
    %1419 = vmatpush1.msra.mxu0 0.0
    %1420 = vmatprep.subr.mxu0 0.0
    %1421 = vmatpush1.msra.mxu0 0.0
    %1422 = vmatprep.subr.mxu0 0.0
    %1423 = vmatpush1.msra.mxu0 0.0
    %1424 = vmatprep.subr.mxu0 0.0
    %1425 = vmatpush1.msra.mxu0 0.0
    %1426 = vmatprep.subr.mxu0 0.0
    %1427 = vmatpush1.msra.mxu0 0.0
    %1428 = vmatprep.subr.mxu0 0.0
    %1429 = vmatpush1.msra.mxu0 0.0
    %1430 = vmatprep.subr.mxu0 0.0
    %1431 = vmatpush1.msra.mxu0 0.0
    %1432 = vmatprep.subr.mxu0 0.0
    %1433 = vmatpush1.msra.mxu0 0.0
    %1434 = vmatprep.subr.mxu0 0.0
    %1435 = vmatpush1.msra.mxu0 0.0
    %1436 = vmatprep.subr.mxu0 0.0
    %1437 = vmatpush1.msra.mxu0 0.0
    %1438 = vmatprep.subr.mxu0 0.0
    %1439 = vmatpush1.msra.mxu0 0.0
    %1440 = vmatprep.subr.mxu0 0.0
    %1441 = vmatpush1.msra.mxu0 0.0
    %1442 = vmatprep.subr.mxu0 0.0
    %1443 = vmatpush1.msra.mxu0 0.0
    %1444 = vmatprep.subr.mxu0 0.0
    %1445 = vmatpush1.msra.mxu0 0.0
    %1446 = vmatprep.subr.mxu0 0.0
    %1447 = vmatpush1.msra.mxu0 0.0
    %1448 = vmatprep.subr.mxu0 0.0
    %1449 = vmatpush1.msra.mxu0 0.0
    %1450 = vmatprep.subr.mxu0 0.0
    %1451 = vmatpush1.msra.mxu0 0.0
    %1452 = vmatprep.subr.mxu0 0.0
    %1453 = vmatpush1.msra.mxu0 0.0
    %1454 = vmatprep.mubr.f32.mxu0 0.0
    %1455 = vmatmul.mubr.f32.gmra.mrb[0].mxu0 %v1388
    %v1456 = vpop.f32.mrb[0].mxu0
    %v1457 = vadd.f32 %v873, %v1456
    %v1458 = vpop.f32.mrb[0].mxu0
    %1459 = vdwg.mxu0
    %v1461 = vsel %vm583, %v27, 0
    %1463 = vmatprep.subr.mxu0 0.0
    %1464 = vmatpush1.msra.mxu0 %v579
    %1465 = vmatprep.subr.mxu0 0.0
    %1466 = vmatpush1.msra.mxu0 0.0
    %1467 = vmatprep.subr.mxu0 0.0
    %1468 = vmatpush1.msra.mxu0 0.0
    %1469 = vmatprep.subr.mxu0 0.0
    %1470 = vmatpush1.msra.mxu0 0.0
    %1471 = vmatprep.subr.mxu0 0.0
    %1472 = vmatpush1.msra.mxu0 0.0
    %1473 = vmatprep.subr.mxu0 0.0
    %1474 = vmatpush1.msra.mxu0 0.0
    %1475 = vmatprep.subr.mxu0 0.0
    %1476 = vmatpush1.msra.mxu0 0.0
    %1477 = vmatprep.subr.mxu0 0.0
    %1478 = vmatpush1.msra.mxu0 0.0
    %1479 = vmatprep.subr.mxu0 0.0
    %1480 = vmatpush1.msra.mxu0 0.0
    %1481 = vmatprep.subr.mxu0 0.0
    %1482 = vmatpush1.msra.mxu0 0.0
    %1483 = vmatprep.subr.mxu0 0.0
    %1484 = vmatpush1.msra.mxu0 0.0
    %1485 = vmatprep.subr.mxu0 0.0
    %1486 = vmatpush1.msra.mxu0 0.0
    %1487 = vmatprep.subr.mxu0 0.0
    %1488 = vmatpush1.msra.mxu0 0.0
    %1489 = vmatprep.subr.mxu0 0.0
    %1490 = vmatpush1.msra.mxu0 0.0
    %1491 = vmatprep.subr.mxu0 0.0
    %1492 = vmatpush1.msra.mxu0 0.0
    %1493 = vmatprep.subr.mxu0 0.0
    %1494 = vmatpush1.msra.mxu0 0.0
    %1495 = vmatprep.subr.mxu0 0.0
    %1496 = vmatpush1.msra.mxu0 0.0
    %1497 = vmatprep.subr.mxu0 0.0
    %1498 = vmatpush1.msra.mxu0 0.0
    %1499 = vmatprep.subr.mxu0 0.0
    %1500 = vmatpush1.msra.mxu0 0.0
    %1501 = vmatprep.subr.mxu0 0.0
    %1502 = vmatpush1.msra.mxu0 0.0
    %1503 = vmatprep.subr.mxu0 0.0
    %1504 = vmatpush1.msra.mxu0 0.0
    %1505 = vmatprep.subr.mxu0 0.0
    %1506 = vmatpush1.msra.mxu0 0.0
    %1507 = vmatprep.subr.mxu0 0.0
    %1508 = vmatpush1.msra.mxu0 0.0
    %1509 = vmatprep.subr.mxu0 0.0
    %1510 = vmatpush1.msra.mxu0 0.0
    %1511 = vmatprep.subr.mxu0 0.0
    %1512 = vmatpush1.msra.mxu0 0.0
    %1513 = vmatprep.subr.mxu0 0.0
    %1514 = vmatpush1.msra.mxu0 0.0
    %1515 = vmatprep.subr.mxu0 0.0
    %1516 = vmatpush1.msra.mxu0 0.0
    %1517 = vmatprep.subr.mxu0 0.0
    %1518 = vmatpush1.msra.mxu0 0.0
    %1519 = vmatprep.subr.mxu0 0.0
    %1520 = vmatpush1.msra.mxu0 0.0
    %1521 = vmatprep.subr.mxu0 0.0
    %1522 = vmatpush1.msra.mxu0 0.0
    %1523 = vmatprep.subr.mxu0 0.0
    %1524 = vmatpush1.msra.mxu0 0.0
    %1525 = vmatprep.subr.mxu0 0.0
    %1526 = vmatpush1.msra.mxu0 0.0
    %1527 = vmatprep.mubr.f32.mxu0 0.0
    %1528 = vmatmul.mubr.f32.gmra.mrb[0].mxu0 %v1461
    %v1529 = vpop.f32.mrb[0].mxu0
    %v1530 = vadd.f32 %v946, %v1529
    %v1531 = vpop.f32.mrb[0].mxu0
    %1532 = vdwg.mxu0
    %v1534 = vsel %vm583, %v28, 0
    %1536 = vmatprep.subr.mxu0 0.0
    %1537 = vmatpush1.msra.mxu0 %v580
    %1538 = vmatprep.subr.mxu0 0.0
    %1539 = vmatpush1.msra.mxu0 0.0
    %1540 = vmatprep.subr.mxu0 0.0
    %1541 = vmatpush1.msra.mxu0 0.0
    %1542 = vmatprep.subr.mxu0 0.0
    %1543 = vmatpush1.msra.mxu0 0.0
    %1544 = vmatprep.subr.mxu0 0.0
    %1545 = vmatpush1.msra.mxu0 0.0
    %1546 = vmatprep.subr.mxu0 0.0
    %1547 = vmatpush1.msra.mxu0 0.0
    %1548 = vmatprep.subr.mxu0 0.0
    %1549 = vmatpush1.msra.mxu0 0.0
    %1550 = vmatprep.subr.mxu0 0.0
    %1551 = vmatpush1.msra.mxu0 0.0
    %1552 = vmatprep.subr.mxu0 0.0
    %1553 = vmatpush1.msra.mxu0 0.0
    %1554 = vmatprep.subr.mxu0 0.0
    %1555 = vmatpush1.msra.mxu0 0.0
    %1556 = vmatprep.subr.mxu0 0.0
    %1557 = vmatpush1.msra.mxu0 0.0
    %1558 = vmatprep.subr.mxu0 0.0
    %1559 = vmatpush1.msra.mxu0 0.0
    %1560 = vmatprep.subr.mxu0 0.0
    %1561 = vmatpush1.msra.mxu0 0.0
    %1562 = vmatprep.subr.mxu0 0.0
    %1563 = vmatpush1.msra.mxu0 0.0
    %1564 = vmatprep.subr.mxu0 0.0
    %1565 = vmatpush1.msra.mxu0 0.0
    %1566 = vmatprep.subr.mxu0 0.0
    %1567 = vmatpush1.msra.mxu0 0.0
    %1568 = vmatprep.subr.mxu0 0.0
    %1569 = vmatpush1.msra.mxu0 0.0
    %1570 = vmatprep.subr.mxu0 0.0
    %1571 = vmatpush1.msra.mxu0 0.0
    %1572 = vmatprep.subr.mxu0 0.0
    %1573 = vmatpush1.msra.mxu0 0.0
    %1574 = vmatprep.subr.mxu0 0.0
    %1575 = vmatpush1.msra.mxu0 0.0
    %1576 = vmatprep.subr.mxu0 0.0
    %1577 = vmatpush1.msra.mxu0 0.0
    %1578 = vmatprep.subr.mxu0 0.0
    %1579 = vmatpush1.msra.mxu0 0.0
    %1580 = vmatprep.subr.mxu0 0.0
    %1581 = vmatpush1.msra.mxu0 0.0
    %1582 = vmatprep.subr.mxu0 0.0
    %1583 = vmatpush1.msra.mxu0 0.0
    %1584 = vmatprep.subr.mxu0 0.0
    %1585 = vmatpush1.msra.mxu0 0.0
    %1586 = vmatprep.subr.mxu0 0.0
    %1587 = vmatpush1.msra.mxu0 0.0
    %1588 = vmatprep.subr.mxu0 0.0
    %1589 = vmatpush1.msra.mxu0 0.0
    %1590 = vmatprep.subr.mxu0 0.0
    %1591 = vmatpush1.msra.mxu0 0.0
    %1592 = vmatprep.subr.mxu0 0.0
    %1593 = vmatpush1.msra.mxu0 0.0
    %1594 = vmatprep.subr.mxu0 0.0
    %1595 = vmatpush1.msra.mxu0 0.0
    %1596 = vmatprep.subr.mxu0 0.0
    %1597 = vmatpush1.msra.mxu0 0.0
    %1598 = vmatprep.subr.mxu0 0.0
    %1599 = vmatpush1.msra.mxu0 0.0
    %1600 = vmatprep.mubr.f32.mxu0 0.0
    %1601 = vmatmul.mubr.f32.gmra.mrb[0].mxu0 %v1534
    %v1602 = vpop.f32.mrb[0].mxu0
    %v1603 = vadd.f32 %v1019, %v1602
    %v1604 = vpop.f32.mrb[0].mxu0
    %1605 = vdwg.mxu0
    %v1607 = vsel %vm583, %v29, 0
    %1609 = vmatprep.subr.mxu0 0.0
    %1610 = vmatpush1.msra.mxu0 %v581
    %1611 = vmatprep.subr.mxu0 0.0
    %1612 = vmatpush1.msra.mxu0 0.0
    %1613 = vmatprep.subr.mxu0 0.0
    %1614 = vmatpush1.msra.mxu0 0.0
    %1615 = vmatprep.subr.mxu0 0.0
    %1616 = vmatpush1.msra.mxu0 0.0
    %1617 = vmatprep.subr.mxu0 0.0
    %1618 = vmatpush1.msra.mxu0 0.0
    %1619 = vmatprep.subr.mxu0 0.0
    %1620 = vmatpush1.msra.mxu0 0.0
    %1621 = vmatprep.subr.mxu0 0.0
    %1622 = vmatpush1.msra.mxu0 0.0
    %1623 = vmatprep.subr.mxu0 0.0
    %1624 = vmatpush1.msra.mxu0 0.0
    %1625 = vmatprep.subr.mxu0 0.0
    %1626 = vmatpush1.msra.mxu0 0.0
    %1627 = vmatprep.subr.mxu0 0.0
    %1628 = vmatpush1.msra.mxu0 0.0
    %1629 = vmatprep.subr.mxu0 0.0
    %1630 = vmatpush1.msra.mxu0 0.0
    %1631 = vmatprep.subr.mxu0 0.0
    %1632 = vmatpush1.msra.mxu0 0.0
    %1633 = vmatprep.subr.mxu0 0.0
    %1634 = vmatpush1.msra.mxu0 0.0
    %1635 = vmatprep.subr.mxu0 0.0
    %1636 = vmatpush1.msra.mxu0 0.0
    %1637 = vmatprep.subr.mxu0 0.0
    %1638 = vmatpush1.msra.mxu0 0.0
    %1639 = vmatprep.subr.mxu0 0.0
    %1640 = vmatpush1.msra.mxu0 0.0
    %1641 = vmatprep.subr.mxu0 0.0
    %1642 = vmatpush1.msra.mxu0 0.0
    %1643 = vmatprep.subr.mxu0 0.0
    %1644 = vmatpush1.msra.mxu0 0.0
    %1645 = vmatprep.subr.mxu0 0.0
    %1646 = vmatpush1.msra.mxu0 0.0
    %1647 = vmatprep.subr.mxu0 0.0
    %1648 = vmatpush1.msra.mxu0 0.0
    %1649 = vmatprep.subr.mxu0 0.0
    %1650 = vmatpush1.msra.mxu0 0.0
    %1651 = vmatprep.subr.mxu0 0.0
    %1652 = vmatpush1.msra.mxu0 0.0
    %1653 = vmatprep.subr.mxu0 0.0
    %1654 = vmatpush1.msra.mxu0 0.0
    %1655 = vmatprep.subr.mxu0 0.0
    %1656 = vmatpush1.msra.mxu0 0.0
    %1657 = vmatprep.subr.mxu0 0.0
    %1658 = vmatpush1.msra.mxu0 0.0
    %1659 = vmatprep.subr.mxu0 0.0
    %1660 = vmatpush1.msra.mxu0 0.0
    %1661 = vmatprep.subr.mxu0 0.0
    %1662 = vmatpush1.msra.mxu0 0.0
    %1663 = vmatprep.subr.mxu0 0.0
    %1664 = vmatpush1.msra.mxu0 0.0
    %1665 = vmatprep.subr.mxu0 0.0
    %1666 = vmatpush1.msra.mxu0 0.0
    %1667 = vmatprep.subr.mxu0 0.0
    %1668 = vmatpush1.msra.mxu0 0.0
    %1669 = vmatprep.subr.mxu0 0.0
    %1670 = vmatpush1.msra.mxu0 0.0
    %1671 = vmatprep.subr.mxu0 0.0
    %1672 = vmatpush1.msra.mxu0 0.0
    %1673 = vmatprep.mubr.f32.mxu0 0.0
    %1674 = vmatmul.mubr.f32.gmra.mrb[0].mxu0 %v1607
    %v1675 = vpop.f32.mrb[0].mxu0
    %v1676 = vadd.f32 %v1092, %v1675
    %v1677 = vpop.f32.mrb[0].mxu0
    %1678 = vdwg.mxu0
    %v1680 = vsel %vm583, %v30, 0
    %1682 = vmatprep.subr.mxu0 0.0
    %1683 = vmatpush1.msra.mxu0 %v582
    %1684 = vmatprep.subr.mxu0 0.0
    %1685 = vmatpush1.msra.mxu0 0.0
    %1686 = vmatprep.subr.mxu0 0.0
    %1687 = vmatpush1.msra.mxu0 0.0
    %1688 = vmatprep.subr.mxu0 0.0
    %1689 = vmatpush1.msra.mxu0 0.0
    %1690 = vmatprep.subr.mxu0 0.0
    %1691 = vmatpush1.msra.mxu0 0.0
    %1692 = vmatprep.subr.mxu0 0.0
    %1693 = vmatpush1.msra.mxu0 0.0
    %1694 = vmatprep.subr.mxu0 0.0
    %1695 = vmatpush1.msra.mxu0 0.0
    %1696 = vmatprep.subr.mxu0 0.0
    %1697 = vmatpush1.msra.mxu0 0.0
    %1698 = vmatprep.subr.mxu0 0.0
    %1699 = vmatpush1.msra.mxu0 0.0
    %1700 = vmatprep.subr.mxu0 0.0
    %1701 = vmatpush1.msra.mxu0 0.0
    %1702 = vmatprep.subr.mxu0 0.0
    %1703 = vmatpush1.msra.mxu0 0.0
    %1704 = vmatprep.subr.mxu0 0.0
    %1705 = vmatpush1.msra.mxu0 0.0
    %1706 = vmatprep.subr.mxu0 0.0
    %1707 = vmatpush1.msra.mxu0 0.0
    %1708 = vmatprep.subr.mxu0 0.0
    %1709 = vmatpush1.msra.mxu0 0.0
    %1710 = vmatprep.subr.mxu0 0.0
    %1711 = vmatpush1.msra.mxu0 0.0
    %1712 = vmatprep.subr.mxu0 0.0
    %1713 = vmatpush1.msra.mxu0 0.0
    %1714 = vmatprep.subr.mxu0 0.0
    %1715 = vmatpush1.msra.mxu0 0.0
    %1716 = vmatprep.subr.mxu0 0.0
    %1717 = vmatpush1.msra.mxu0 0.0
    %1718 = vmatprep.subr.mxu0 0.0
    %1719 = vmatpush1.msra.mxu0 0.0
    %1720 = vmatprep.subr.mxu0 0.0
    %1721 = vmatpush1.msra.mxu0 0.0
    %1722 = vmatprep.subr.mxu0 0.0
    %1723 = vmatpush1.msra.mxu0 0.0
    %1724 = vmatprep.subr.mxu0 0.0
    %1725 = vmatpush1.msra.mxu0 0.0
    %1726 = vmatprep.subr.mxu0 0.0
    %1727 = vmatpush1.msra.mxu0 0.0
    %1728 = vmatprep.subr.mxu0 0.0
    %1729 = vmatpush1.msra.mxu0 0.0
    %1730 = vmatprep.subr.mxu0 0.0
    %1731 = vmatpush1.msra.mxu0 0.0
    %1732 = vmatprep.subr.mxu0 0.0
    %1733 = vmatpush1.msra.mxu0 0.0
    %1734 = vmatprep.subr.mxu0 0.0
    %1735 = vmatpush1.msra.mxu0 0.0
    %1736 = vmatprep.subr.mxu0 0.0
    %1737 = vmatpush1.msra.mxu0 0.0
    %1738 = vmatprep.subr.mxu0 0.0
    %1739 = vmatpush1.msra.mxu0 0.0
    %1740 = vmatprep.subr.mxu0 0.0
    %1741 = vmatpush1.msra.mxu0 0.0
    %1742 = vmatprep.subr.mxu0 0.0
    %1743 = vmatpush1.msra.mxu0 0.0
    %1744 = vmatprep.subr.mxu0 0.0
    %1745 = vmatpush1.msra.mxu0 0.0
    %1746 = vmatprep.mubr.f32.mxu0 0.0
    %1747 = vmatmul.mubr.f32.gmra.mrb[0].mxu0 %v1680
    %v1748 = vpop.f32.mrb[0].mxu0
    %v1749 = vadd.f32 %v1165, %v1748
    %v1750 = vpop.f32.mrb[0].mxu0
    %1751 = vdwg.mxu0
    %1752 = vst.msk [vmem:[#allocation5] sm:$0xff] %vm583, %v1238
    %1753 = vst.msk [vmem:[#allocation5 + $0x8] sm:$0xff] %vm583, %v1311
    %1754 = vst.msk [vmem:[#allocation5 + $0x10] sm:$0xff] %vm583, %v1384
    %1755 = vst.msk [vmem:[#allocation5 + $0x18] sm:$0xff] %vm583, %v1457
    %1756 = vst.msk [vmem:[#allocation5 + $0x20] sm:$0xff] %vm583, %v1530
    %1757 = vst.msk [vmem:[#allocation5 + $0x28] sm:$0xff] %vm583, %v1603
    %1758 = vst.msk [vmem:[#allocation5 + $0x30] sm:$0xff] %vm583, %v1676
    %1759 = vst.msk [vmem:[#allocation5 + $0x38] sm:$0xff] %vm583, %v1749
    // Predicated region
    $region10: #{tpu_custom_call.1} parent=1 // pred_check
      _
    $region11: #{tpu_custom_call.1} parent=1 // pred_check_branch
      %1761 = sbr.rel (0) target = $region13
    $region12: #{tpu_custom_call.1} parent=1 // pred_region
      %s1763 = ssub.s32 1024, 1024
      %1764 = vsyncadd [#allocation4], %s1763
      %s1765 = sshll.u32 [#allocation5], 4
      %s1766 = int_to_ptr.vmem [resolvable:$true] %s1765
      %1771 = dma.vmem_to_hbm [thread:$0]  %s1766, 1024, %s1, [#allocation4], 128, 128, 8
    $region13: #{tpu_custom_call.1} parent=1 // pred_fallthru
      _
    // Predicated region
    $region14: #{tpu_custom_call.1} parent=1 // pred_check
      _
    $region15: #{tpu_custom_call.1} parent=1 // pred_check_branch
      %1773 = sbr.rel (0) target = $region17
    $region16: #{tpu_custom_call.1} parent=1 // pred_region
      %1774 = dma.done [#allocation4], 1024
    $region17: #{tpu_custom_call.1} parent=1 // pred_fallthru
      _
    %1775 = vsyncpa [#allocation3], 1
    %1776 = vsyncpa [#allocation4], 1

</llo_original>
